<compile_context>
chip_gen: v5e
topology: v5e:2x2
jax: 0.10.0
libtpu: 0.0.40
codegen_flags: <defaults>
</compile_context>

<pallas_src>
import math

import jax
import jax.numpy as jnp
from jax import lax
from jax.experimental import pallas as pl
from jax.experimental.pallas import tpu as pltpu


# ------------------------------ helpers -------------------------------------


def _round_up(x, m):
    return ((x + m - 1) // m) * m


def _use_bf16_weights():
    """bf16 one-hot weight build only where the VPU/MXU like bf16 (v6e/v7x).
    v5e (and older) have no bf16 VALU, so keep the weight build in f32 there."""
    try:
        kind = jax.devices()[0].device_kind.lower()
    except Exception:
        return False
    return ("v6" in kind) or ("v7" in kind)


def _pick_k_tile(d, max_tile=4096):
    """K-tile for the backbone matmul: whole d if it fits (single grid step =
    no per-step epilogue), else the largest multiple-of-128 divisor <= max_tile."""
    if d <= max_tile:
        return d
    best = d
    t = 128
    while t <= max_tile:
        if d % t == 0:
            best = t
        t += 128
    return best


# ----------------------------- Pallas kernels ------------------------------


def regressor_kernel(x_ref, wb_ref, bb_ref, w1_ref, b1_ref, w2_ref, b2_ref,
                     o_ref, acc_ref):
    """theta = relu(relu(x @ wb + bb) @ w1 + b1) @ w2 + b2   (fused, K-tiled).

    Weight-streaming bound at small N: the MXU runs a 2-row LHS, so runtime is
    set by DMA-ing `wb`; the K grid just keeps the accumulator in VMEM."""
    k = pl.program_id(0)

    @pl.when(k == 0)
    def _():
        acc_ref[...] = jnp.zeros_like(acc_ref)

    acc_ref[...] += jnp.dot(x_ref[...], wb_ref[...],
                            preferred_element_type=jnp.float32)

    @pl.when(k == pl.num_programs(0) - 1)
    def _():
        feat = jnp.maximum(acc_ref[...] + bb_ref[...], 0.0)
        h = jnp.maximum(
            jnp.dot(feat, w1_ref[...], preferred_element_type=jnp.float32)
            + b1_ref[...], 0.0)
        o_ref[...] = (jnp.dot(h, w2_ref[...], preferred_element_type=jnp.float32)
                      + b2_ref[...]).astype(o_ref.dtype)


def make_warp_sample_kernel(H, W, Hp, Wp, hw_in, tile, win, n_chunks, use_bf16):
    """Affine grid generation + bilinear grid_sample (zeros, align_corners=False).

    Samples the right/bottom zero-padded (Hp, Wp) image directly from the
    UN-padded (H, W) source: a bilinear corner contributes iff it lands inside
    [0,H)x[0,W) (grid_sample's zero padding outside (Hp,Wp) and the explicit
    zero pad inside [H,Hp)x[W,Wp) collapse to the same condition), and the
    warped all-ones mask is simply the sum of the valid corner weights -- so
    neither the padded image nor the mask is ever materialized in HBM.

    One grid step produces one lane-dense `tile` of output pixels for one batch
    element; the bilinear gather is an MXU matmul against a one-hot weight
    matrix m built over a dynamically positioned window of `win` input pixels
    (win == hw_in -> plain full scan).  If a tile's sampling footprint ever
    exceeds the window (large scale / rotation), a runtime check falls back to
    accumulating over ceil(hw_in/win) chunks, so the result stays exact.
    """
    windowed = win < hw_in
    w_dtype = jnp.bfloat16 if use_bf16 else jnp.float32

    def warp_sample_kernel(t_ref, img_ref, out_ref):
        # t_ref  : (N, 6) SMEM  -- row-major 2x3 affine matrix per batch element
        #          (already matrix-exponentiated and composed with the global
        #          transform).
        # img_ref: (1, C, hw_in) VMEM -- un-padded image, W fastest.
        # out_ref: (1, C+1, tile)     -- C image rows + 1 mask row, lane-dense.
        n = pl.program_id(0)
        ti = pl.program_id(1)
        cch = img_ref.shape[1]
        t00 = t_ref[n, 0]; t01 = t_ref[n, 1]; t02 = t_ref[n, 2]
        t10 = t_ref[n, 3]; t11 = t_ref[n, 4]; t12 = t_ref[n, 5]

        # Output-pixel flat index over the padded Hp x Wp raster -> (row, col).
        # (Float divide + floor is exact for Hp*Wp < 2**24.)
        p = lax.broadcasted_iota(jnp.int32, (1, tile), 1) + ti * tile
        pf = p.astype(jnp.float32)
        pi = jnp.floor(pf / Wp)                 # output row
        pj = pf - pi * Wp                       # output col

        # Normalized sampling coords (affine_grid, align_corners=False centers).
        xn = (2.0 * pj + 1.0) / Wp - 1.0
        yn = (2.0 * pi + 1.0) / Hp - 1.0

        # Affine transform of the sampling grid (theta acting on [x, y, 1]).
        gx = t00 * xn + t01 * yn + t02
        gy = t10 * xn + t11 * yn + t12

        # Unnormalize to *padded* input pixel coords (grid_sample, a_c=False).
        ix = ((gx + 1.0) * Wp - 1.0) * 0.5
        iy = ((gy + 1.0) * Hp - 1.0) * 0.5
        x0f = jnp.floor(ix); y0f = jnp.floor(iy)
        wx1 = ix - x0f; wx0 = 1.0 - wx1
        wy1 = iy - y0f; wy0 = 1.0 - wy1
        x0 = x0f.astype(jnp.int32); y0 = y0f.astype(jnp.int32)
        x1 = x0 + 1; y1 = y0 + 1

        # A corner contributes iff it lies inside the ORIGINAL (H, W) image;
        # fold that validity into the weights BEFORE the big broadcast so flat-
        # index collisions of invalid corners contribute exactly nothing.
        def vw(yc, xc, w):
            valid = (yc >= 0) & (yc < H) & (xc >= 0) & (xc < W)
            return jnp.where(valid, w, 0.0)                        # (1, tile) f32

        w00 = vw(y0, x0, wy0 * wx0)
        w01 = vw(y0, x1, wy0 * wx1)
        w10 = vw(y1, x0, wy1 * wx0)
        w11 = vw(y1, x1, wy1 * wx1)

        # Warped mask = sum of valid corner weights (mask is all-ones on (H, W)).
        out_ref[0, cch:cch + 1, :] = (w00 + w01 + w10 + w11).astype(out_ref.dtype)

        # Shared flat-index difference: corner 00 hits at d==0, 01 at d==1,
        # 10 at d==W, 11 at d==W+1 (one broadcast int subtract, four compares).
        f00 = y0 * W + x0                                          # (1, tile)
        w00c = w00.astype(w_dtype); w01c = w01.astype(w_dtype)
        w10c = w10.astype(w_dtype); w11c = w11.astype(w_dtype)
        zero = jnp.zeros((), w_dtype)

        def chunk(start, lo=None):
            # (cch, tile) contribution of input pixels [start, start + win).
            q = lax.broadcasted_iota(jnp.int32, (win, 1), 0) + start
            d = q - f00                                            # (win, tile)
            m = jnp.where(d == 0, w00c, zero)
            m = m + jnp.where(d == 1, w01c, zero)
            m = m + jnp.where(d == W, w10c, zero)
            m = m + jnp.where(d == W + 1, w11c, zero)
            if lo is not None:                   # fallback only: drop rows that
                m = jnp.where(q >= lo, m, zero)  # overlap the previous chunk
            if isinstance(start, int) and start == 0 and win == hw_in:
                lhs = img_ref[0]
            else:
                lhs = img_ref[0, :, pl.ds(start, win)]
            if use_bf16:
                lhs = lhs.astype(jnp.bfloat16)
            return jnp.dot(lhs, m, preferred_element_type=jnp.float32)

        if not windowed:
            out_ref[0, 0:cch, :] = chunk(0).astype(out_ref.dtype)
        else:
            # Window base from the tile's min (clamped) corner flat index;
            # clamped indices bound every *valid* corner's true index.
            fc_lo = jnp.clip(y0, 0, H - 1) * W + jnp.clip(x0, 0, W - 1)
            fc_hi = jnp.clip(y1, 0, H - 1) * W + jnp.clip(x1, 0, W - 1)
            base_cap = ((hw_in - win) // 128) * 128
            base = jnp.minimum((jnp.min(fc_lo) // 128) * 128, base_cap)
            base = pl.multiple_of(jnp.maximum(base, 0), 128)
            fits = jnp.max(fc_hi) < base + win

            @pl.when(fits)
            def _():
                out_ref[0, 0:cch, :] = chunk(base).astype(out_ref.dtype)

            @pl.when(jnp.logical_not(fits))
            def _():
                # Cold path: footprint wider than the window (large scale /
                # rotation) -- accumulate same-sized chunks over all of hw_in.
                def body(c, acc):
                    start = jnp.minimum(c * win, hw_in - win)
                    return acc + chunk(start, lo=c * win)
                acc = lax.fori_loop(0, n_chunks, body,
                                    jnp.zeros((cch, tile), jnp.float32))
                out_ref[0, 0:cch, :] = acc.astype(out_ref.dtype)

    return warp_sample_kernel


# ------------------------------ JAX glue ------------------------------------


def expm_batch(A, order=12, squarings=8):
    """Matrix exponential via fixed scaling-and-squaring + Taylor (tiny 3x3 glue)."""
    A = A / (2.0 ** squarings)
    eye = jnp.broadcast_to(jnp.eye(A.shape[-1], dtype=A.dtype), A.shape)
    result = eye
    term = eye
    for k in range(1, order + 1):
        term = jnp.matmul(term, A) / k
        result = result + term
    for _ in range(squarings):
        result = jnp.matmul(result, result)
    return result


def init_params(key, in_channels, mask_shape, feature_dim=64, hidden_size=32):
    H, W = mask_shape
    d_in = in_channels * H * W
    k1, k2, k3, k4, k5 = jax.random.split(key, 5)
    return {
        # backbone stand-in (see TODO at top of file)
        "wb": jax.random.normal(k1, (d_in, feature_dim), jnp.float32) * 0.02,
        "bb": jnp.zeros((1, feature_dim), jnp.float32),
        # affine_theta_regressor[0]
        "w1": jax.random.normal(k2, (feature_dim, hidden_size), jnp.float32)
              * (1.0 / math.sqrt(feature_dim)),
        "b1": jax.random.normal(k3, (1, hidden_size), jnp.float32) * 0.01,
        # affine_theta_regressor[-1] : nn.init.normal_(std=1e-5) on weight & bias
        "w2": jax.random.normal(k4, (hidden_size, 6), jnp.float32) * 1e-5,
        "b2": jax.random.normal(k5, (1, 6), jnp.float32) * 1e-5,
    }


def warp_grid_sample(image, t23, pad):
    """Pallas affine warp + bilinear grid_sample of the right/bottom zero-padded
    `image` (and its implicit all-ones mask).  Equivalent to
        F.grid_sample(F.pad(image, (0, pw, 0, ph)), grid)   and
        F.grid_sample(pad(ones).expand_as(image),   grid)
    with grid = t23 @ [x, y, 1] over the padded (Hp, Wp) output raster.
    Returns (warped_image (N,C,Hp,Wp), warped_mask (N,1,Hp,Wp))."""
    N, C, H, W = image.shape
    ph, pw = pad
    Hp, Wp = H + ph, W + pw
    hw_in = H * W
    hw_out = Hp * Wp
    use_bf16 = _use_bf16_weights()

    # Lane-dense output tiling: one fat tile when the whole raster is small,
    # otherwise 512-wide tiles with a bounded input window per tile.
    if hw_out <= 2048:
        tile = _round_up(hw_out, 128)
        win = hw_in                      # full scan, no dynamic window
    else:
        tile = 512
        rows = -(-tile // Wp) + 2        # output rows spanned by one tile (+bilinear)
        # 2x-scale / small-rotation safety margin; larger transforms hit the
        # in-kernel chunked fallback instead of going wrong.
        win = _round_up((2 * rows + 6) * W, 128)
        if win >= hw_in:
            win = hw_in
    num_tiles = -(-hw_out // tile)
    n_chunks = -(-hw_in // win)

    kernel = make_warp_sample_kernel(H, W, Hp, Wp, hw_in, tile, win, n_chunks,
                                     use_bf16)
    out = pl.pallas_call(
        kernel,
        out_shape=jax.ShapeDtypeStruct((N, C + 1, num_tiles * tile), jnp.float32),
        grid=(N, num_tiles),
        in_specs=[pl.BlockSpec(memory_space=pltpu.MemorySpace.SMEM),
                  pl.BlockSpec((1, C, hw_in), lambda n, t: (n, 0, 0))],
        out_specs=pl.BlockSpec((1, C + 1, tile), lambda n, t: (n, 0, t)),
        compiler_params=pltpu.CompilerParams(
            # batch axis "parallel": disjoint images per core under v7x
            # megacore; tile axis "arbitrary": keeps the image block resident.
            dimension_semantics=("parallel", "arbitrary"),
            vmem_limit_bytes=32 * 1024 * 1024),
    )(t23.astype(jnp.float32), image.reshape(N, C, hw_in).astype(jnp.float32))

    out = out[:, :, :hw_out].reshape(N, C + 1, Hp, Wp)
    return out[:, :C], out[:, C:C + 1]


def stn_block_forward(params, image, mask_shape, pad, global_transform):
    N, C, H, W = image.shape
    assert tuple(mask_shape) == (H, W)
    d_in = C * H * W
    feat_dim = params["wb"].shape[1]
    hidden = params["w1"].shape[1]

    # ---- fused backbone stand-in + affine_theta_regressor (single dispatch) --
    x_flat = image.reshape(N, d_in).astype(jnp.float32)
    tk = _pick_k_tile(d_in)
    k_steps = d_in // tk
    theta = pl.pallas_call(
        regressor_kernel,
        out_shape=jax.ShapeDtypeStruct((N, 6), jnp.float32),
        grid=(k_steps,),
        in_specs=[
            pl.BlockSpec((N, tk), lambda k: (0, k)),
            pl.BlockSpec((tk, feat_dim), lambda k: (k, 0)),
            pl.BlockSpec((1, feat_dim), lambda k: (0, 0)),
            pl.BlockSpec((feat_dim, hidden), lambda k: (0, 0)),
            pl.BlockSpec((1, hidden), lambda k: (0, 0)),
            pl.BlockSpec((hidden, 6), lambda k: (0, 0)),
            pl.BlockSpec((1, 6), lambda k: (0, 0)),
        ],
        out_specs=pl.BlockSpec((N, 6), lambda k: (0, 0)),
        scratch_shapes=[pltpu.VMEM((N, feat_dim), jnp.float32)],
        compiler_params=pltpu.CompilerParams(
            dimension_semantics=("arbitrary",),
            vmem_limit_bytes=32 * 1024 * 1024),
    )(x_flat, params["wb"], params["bb"], params["w1"], params["b1"],
      params["w2"], params["b2"])

    # ---- affine_warp(theta, shape, exp=True, global_transform=...) ----------
    # TODO(synk): exact affine_warp/homography_warp sources are not provided;
    # assumed: grid = (expm([[theta_2x3],[0,0,0]]) @ global_transform)[:2] @ [x,y,1].
    A = jnp.zeros((N, 3, 3), jnp.float32).at[:, :2, :].set(theta.reshape(N, 2, 3))
    T = expm_batch(A) @ global_transform.astype(jnp.float32)      # (N, 3, 3)
    t23 = T[:, :2, :].reshape(N, 6)

    # ---- pad_image_and_mask + grid generation + F.grid_sample (fused) --------
    warped_image, warped_mask1 = warp_grid_sample(image, t23, pad)
    Hp, Wp = H + pad[0], W + pad[1]
    warped_mask = jnp.broadcast_to(warped_mask1, (N, C, Hp, Wp))
    transform = {"affine": theta}
    return warped_image, warped_mask, transform


def _reference_grid_sample(img, t23):
    """Pure-JAX bilinear grid_sample (zeros padding, align_corners=False) used
    as an independent correctness check of the Pallas warp kernel."""
    N, C, Hp, Wp = img.shape
    xn = (2.0 * jnp.arange(Wp, dtype=jnp.float32) + 1.0) / Wp - 1.0
    yn = (2.0 * jnp.arange(Hp, dtype=jnp.float32) + 1.0) / Hp - 1.0
    xn, yn = jnp.meshgrid(xn, yn)                                   # (Hp, Wp)
    t = t23.reshape(N, 2, 3)
    gx = (t[:, 0, 0, None, None] * xn + t[:, 0, 1, None, None] * yn
          + t[:, 0, 2, None, None])
    gy = (t[:, 1, 0, None, None] * xn + t[:, 1, 1, None, None] * yn
          + t[:, 1, 2, None, None])
    ix = ((gx + 1.0) * Wp - 1.0) * 0.5
    iy = ((gy + 1.0) * Hp - 1.0) * 0.5
    x0 = jnp.floor(ix); y0 = jnp.floor(iy)
    wx1 = ix - x0; wx0 = 1.0 - wx1
    wy1 = iy - y0; wy0 = 1.0 - wy1

    def corner(yc, xc, w):
        valid = ((yc >= 0) & (yc < Hp) & (xc >= 0) & (xc < Wp)).astype(jnp.float32)
        flat = (jnp.clip(yc, 0, Hp - 1) * Wp + jnp.clip(xc, 0, Wp - 1)).astype(jnp.int32)
        v = jax.vmap(lambda im, f: im.reshape(C, Hp * Wp)[:, f.reshape(-1)])(img, flat)
        return v.reshape(N, C, Hp, Wp) * (w * valid)[:, None, :, :]

    return (corner(y0, x0, wy0 * wx0) + corner(y0, x0 + 1, wy0 * wx1)
            + corner(y0 + 1, x0, wy1 * wx0) + corner(y0 + 1, x0 + 1, wy1 * wx1))


# ------------------------------ demo ----------------------------------------

if __name__ == "__main__":
    key = jax.random.PRNGKey(0)
    kp, kx, ky = jax.random.split(key, 3)

    # bf16 one-hot weights (v6e/v7x) cost ~0.4% relative error on the bilinear
    # interpolation; loosen the reference tolerance accordingly.
    use_bf16 = _use_bf16_weights()
    atol = 6e-2 if use_bf16 else 1e-3
    rtol = 2e-2 if use_bf16 else 1e-3

    # --- full STN_block forward at the module's demo scale --------------------
    mask_shape = (16, 16)          # spatial size of the input image / mask
    pad = (2, 4)                   # (bottom, right) pad, as F.pad(x, (0, pad[1], 0, pad[0]))
    t = (0.1, -0.1)                # global translation parameter
    N, C = 2, 3                    # resnet-style 3-channel input

    params = init_params(kp, C, mask_shape)
    global_transform = jnp.array([[1.0, 0.0, t[0]],
                                  [0.0, 1.0, t[1]],
                                  [0.0, 0.0, 1.0]], jnp.float32)
    image = jax.random.normal(kx, (N, C, *mask_shape), jnp.float32)

    fwd = jax.jit(lambda p, x: stn_block_forward(p, x, mask_shape, pad,
                                                 global_transform))
    warped_image, warped_mask, transform = fwd(params, image)
    jax.block_until_ready((warped_image, warped_mask, transform))

    Hp, Wp = mask_shape[0] + pad[0], mask_shape[1] + pad[1]
    assert warped_image.shape == (N, C, Hp, Wp)
    assert warped_mask.shape == (N, C, Hp, Wp)
    assert transform["affine"].shape == (N, 6)
    assert bool(jnp.all(jnp.isfinite(warped_image)))
    assert bool(jnp.all(jnp.isfinite(warped_mask)))

    # Independent pure-JAX check of the warp stage (same theta composition).
    theta = transform["affine"]
    A = jnp.zeros((N, 3, 3), jnp.float32).at[:, :2, :].set(theta.reshape(N, 2, 3))
    t23 = (expm_batch(A) @ global_transform)[:, :2, :].reshape(N, 6)
    img_p = jnp.pad(image, ((0, 0), (0, 0), (0, pad[0]), (0, pad[1])))
    mask_p = jnp.broadcast_to(
        jnp.pad(jnp.ones(mask_shape, jnp.float32), ((0, pad[0]), (0, pad[1]))),
        img_p.shape)
    assert bool(jnp.allclose(_reference_grid_sample(img_p, t23), warped_image,
                             atol=atol, rtol=rtol))
    assert bool(jnp.allclose(_reference_grid_sample(mask_p, t23), warped_mask,
                             atol=atol, rtol=rtol))

    # --- larger warp-only checks: windowed fast path and chunked fallback -----
    H2 = W2 = 64
    image2 = jax.random.normal(ky, (N, C, H2, W2), jnp.float32)
    warp2 = jax.jit(lambda img, tt: warp_grid_sample(img, tt, pad))

    t_near = jnp.tile(jnp.array([[1.02, 0.01, 0.05, -0.01, 0.98, -0.05]],
                                jnp.float32), (N, 1))   # fits the input window
    t_wide = jnp.tile(jnp.array([[4.0, 0.3, 0.1, -0.3, 4.0, -0.1]],
                                jnp.float32), (N, 1))   # trips the chunked fallback
    img2_p = jnp.pad(image2, ((0, 0), (0, 0), (0, pad[0]), (0, pad[1])))
    mask2_p = jnp.broadcast_to(
        jnp.pad(jnp.ones((H2, W2), jnp.float32), ((0, pad[0]), (0, pad[1]))),
        img2_p.shape)
    for t2 in (t_near, t_wide):
        wi, wm = warp2(image2, t2)
        jax.block_until_ready((wi, wm))
        assert bool(jnp.allclose(_reference_grid_sample(img2_p, t2), wi,
                                 atol=atol, rtol=rtol))
        assert bool(jnp.allclose(_reference_grid_sample(mask2_p, t2),
                                 jnp.broadcast_to(wm, mask2_p.shape),
                                 atol=atol, rtol=rtol))

    print("KERNEL_OK")
</pallas_src>

<mosaic_0001>
module attributes {stable_mosaic.version = 11 : i64} {
  func.func @regressor_kernel(%arg0: i32, %arg1: memref<2x768xf32, #tpu.memory_space<vmem>>, %arg2: memref<768x64xf32, #tpu.memory_space<vmem>>, %arg3: memref<1x64xf32, #tpu.memory_space<vmem>>, %arg4: memref<64x32xf32, #tpu.memory_space<vmem>>, %arg5: memref<1x32xf32, #tpu.memory_space<vmem>>, %arg6: memref<32x6xf32, #tpu.memory_space<vmem>>, %arg7: memref<1x6xf32, #tpu.memory_space<vmem>>, %arg8: memref<2x6xf32, #tpu.memory_space<vmem>>, %arg9: memref<2x64xf32, #tpu.memory_space<vmem>>) attributes {dimension_semantics = [#tpu.dimension_semantics<arbitrary>], iteration_bounds = array<i64: 1>, scalar_prefetch = 0 : i64, scratch_operands = 1 : i64, tpu.core_type = #tpu.core_type<tc>, window_params = [{transform_indices = @transform_0, window_bounds = array<i64: 2, 768>}, {transform_indices = @transform_1, window_bounds = array<i64: 768, 64>}, {pipeline_mode = #tpu.pipeline_mode<synchronous>, transform_indices = @transform_2, window_bounds = array<i64: 1, 64>}, {pipeline_mode = #tpu.pipeline_mode<synchronous>, transform_indices = @transform_3, window_bounds = array<i64: 64, 32>}, {pipeline_mode = #tpu.pipeline_mode<synchronous>, transform_indices = @transform_4, window_bounds = array<i64: 1, 32>}, {pipeline_mode = #tpu.pipeline_mode<synchronous>, transform_indices = @transform_5, window_bounds = array<i64: 32, 6>}, {pipeline_mode = #tpu.pipeline_mode<synchronous>, transform_indices = @transform_6, window_bounds = array<i64: 1, 6>}, {pipeline_mode = #tpu.pipeline_mode<synchronous>, transform_indices = @transform_7, window_bounds = array<i64: 2, 6>}]} {
    %c0_i32 = arith.constant 0 : i32
    %0 = arith.cmpi eq, %arg0, %c0_i32 : i32
    %1 = arith.extui %0 : i1 to i32
    %c0_i32_0 = arith.constant 0 : i32
    %2 = arith.cmpi ne, %1, %c0_i32_0 : i32
    scf.if %2 {
      %cst_10 = arith.constant 0.000000e+00 : f32
      %12 = vector.broadcast %cst_10 : f32 to vector<2x64xf32>
      %c0_11 = arith.constant 0 : index
      %c0_12 = arith.constant 0 : index
      %13 = vector.load %arg9[%c0_11, %c0_12] : memref<2x64xf32, #tpu.memory_space<vmem>>, vector<2x64xf32>
      tpu.vector_store %arg9[%c0_11, %c0_12], %12 {strides = array<i32>} : memref<2x64xf32, #tpu.memory_space<vmem>>, vector<2x64xf32>,
    } else {
    }
    %c0 = arith.constant 0 : index
    %c0_1 = arith.constant 0 : index
    %3 = vector.load %arg9[%c0, %c0_1] : memref<2x64xf32, #tpu.memory_space<vmem>>, vector<2x64xf32>
    %c0_2 = arith.constant 0 : index
    %c0_3 = arith.constant 0 : index
    %4 = vector.load %arg1[%c0_2, %c0_3] : memref<2x768xf32, #tpu.memory_space<vmem>>, vector<2x768xf32>
    %c0_4 = arith.constant 0 : index
    %c0_5 = arith.constant 0 : index
    %5 = vector.load %arg2[%c0_4, %c0_5] : memref<768x64xf32, #tpu.memory_space<vmem>>, vector<768x64xf32>
    %cst = arith.constant dense<0.000000e+00> : vector<2x64xf32>
    %6 = tpu.matmul %4, %5, %cst {dimension_numbers = #tpu.dot_dimension_numbers<[1], [0], [0], [1], [0, 0, 1, 1], [], []>} : vector<2x768xf32>, vector<768x64xf32>, vector<2x64xf32> -> vector<2x64xf32>
    %7 = arith.addf %3, %6 : vector<2x64xf32>
    %c0_6 = arith.constant 0 : index
    %c0_7 = arith.constant 0 : index
    %8 = vector.load %arg9[%c0_6, %c0_7] : memref<2x64xf32, #tpu.memory_space<vmem>>, vector<2x64xf32>
    tpu.vector_store %arg9[%c0_6, %c0_7], %7 {strides = array<i32>} : memref<2x64xf32, #tpu.memory_space<vmem>>, vector<2x64xf32>,
    %c0_i32_8 = arith.constant 0 : i32
    %9 = arith.cmpi eq, %arg0, %c0_i32_8 : i32
    %10 = arith.extui %9 : i1 to i32
    %c0_i32_9 = arith.constant 0 : i32
    %11 = arith.cmpi ne, %10, %c0_i32_9 : i32
    scf.if %11 {
      %c0_10 = arith.constant 0 : index
      %c0_11 = arith.constant 0 : index
      %12 = vector.load %arg9[%c0_10, %c0_11] : memref<2x64xf32, #tpu.memory_space<vmem>>, vector<2x64xf32>
      %c0_12 = arith.constant 0 : index
      %c0_13 = arith.constant 0 : index
      %13 = vector.load %arg3[%c0_12, %c0_13] : memref<1x64xf32, #tpu.memory_space<vmem>>, vector<1x64xf32>
      %14 = vector.broadcast %13 : vector<1x64xf32> to vector<2x64xf32>
      %15 = arith.addf %12, %14 : vector<2x64xf32>
      %cst_14 = arith.constant 0.000000e+00 : f32
      %16 = vector.broadcast %cst_14 : f32 to vector<2x64xf32>
      %17 = arith.maximumf %15, %16 : vector<2x64xf32>
      %c0_15 = arith.constant 0 : index
      %c0_16 = arith.constant 0 : index
      %18 = vector.load %arg4[%c0_15, %c0_16] : memref<64x32xf32, #tpu.memory_space<vmem>>, vector<64x32xf32>
      %cst_17 = arith.constant dense<0.000000e+00> : vector<2x32xf32>
      %19 = tpu.matmul %17, %18, %cst_17 {dimension_numbers = #tpu.dot_dimension_numbers<[1], [0], [0], [1], [0, 0, 1, 1], [], []>} : vector<2x64xf32>, vector<64x32xf32>, vector<2x32xf32> -> vector<2x32xf32>
      %c0_18 = arith.constant 0 : index
      %c0_19 = arith.constant 0 : index
      %20 = vector.load %arg5[%c0_18, %c0_19] : memref<1x32xf32, #tpu.memory_space<vmem>>, vector<1x32xf32>
      %21 = vector.broadcast %20 : vector<1x32xf32> to vector<2x32xf32>
      %22 = arith.addf %19, %21 : vector<2x32xf32>
      %cst_20 = arith.constant 0.000000e+00 : f32
      %23 = vector.broadcast %cst_20 : f32 to vector<2x32xf32>
      %24 = arith.maximumf %22, %23 : vector<2x32xf32>
      %c0_21 = arith.constant 0 : index
      %c0_22 = arith.constant 0 : index
      %25 = vector.load %arg6[%c0_21, %c0_22] : memref<32x6xf32, #tpu.memory_space<vmem>>, vector<32x6xf32>
      %cst_23 = arith.constant dense<0.000000e+00> : vector<2x6xf32>
      %26 = tpu.matmul %24, %25, %cst_23 {dimension_numbers = #tpu.dot_dimension_numbers<[1], [0], [0], [1], [0, 0, 1, 1], [], []>} : vector<2x32xf32>, vector<32x6xf32>, vector<2x6xf32> -> vector<2x6xf32>
      %c0_24 = arith.constant 0 : index
      %c0_25 = arith.constant 0 : index
      %27 = vector.load %arg7[%c0_24, %c0_25] : memref<1x6xf32, #tpu.memory_space<vmem>>, vector<1x6xf32>
      %28 = vector.broadcast %27 : vector<1x6xf32> to vector<2x6xf32>
      %29 = arith.addf %26, %28 : vector<2x6xf32>
      %c0_26 = arith.constant 0 : index
      %c0_27 = arith.constant 0 : index
      %30 = vector.load %arg8[%c0_26, %c0_27] : memref<2x6xf32, #tpu.memory_space<vmem>>, vector<2x6xf32>
      tpu.vector_store %arg8[%c0_26, %c0_27], %29 {strides = array<i32>} : memref<2x6xf32, #tpu.memory_space<vmem>>, vector<2x6xf32>,
    } else {
    }
    return
  }
  func.func @transform_0(%arg0: i32) -> (i32, i32) {
    %c0_i32 = arith.constant 0 : i32
    %c0_i32_0 = arith.constant 0 : i32
    return %c0_i32, %arg0 : i32, i32
  }
  func.func @transform_1(%arg0: i32) -> (i32, i32) {
    %c0_i32 = arith.constant 0 : i32
    %c0_i32_0 = arith.constant 0 : i32
    return %arg0, %c0_i32 : i32, i32
  }
  func.func @transform_2(%arg0: i32) -> (i32, i32) {
    %c0_i32 = arith.constant 0 : i32
    %c0_i32_0 = arith.constant 0 : i32
    %c0_i32_1 = arith.constant 0 : i32
    return %c0_i32, %c0_i32_0 : i32, i32
  }
  func.func @transform_3(%arg0: i32) -> (i32, i32) {
    %c0_i32 = arith.constant 0 : i32
    %c0_i32_0 = arith.constant 0 : i32
    %c0_i32_1 = arith.constant 0 : i32
    return %c0_i32, %c0_i32_0 : i32, i32
  }
  func.func @transform_4(%arg0: i32) -> (i32, i32) {
    %c0_i32 = arith.constant 0 : i32
    %c0_i32_0 = arith.constant 0 : i32
    %c0_i32_1 = arith.constant 0 : i32
    return %c0_i32, %c0_i32_0 : i32, i32
  }
  func.func @transform_5(%arg0: i32) -> (i32, i32) {
    %c0_i32 = arith.constant 0 : i32
    %c0_i32_0 = arith.constant 0 : i32
    %c0_i32_1 = arith.constant 0 : i32
    return %c0_i32, %c0_i32_0 : i32, i32
  }
  func.func @transform_6(%arg0: i32) -> (i32, i32) {
    %c0_i32 = arith.constant 0 : i32
    %c0_i32_0 = arith.constant 0 : i32
    %c0_i32_1 = arith.constant 0 : i32
    return %c0_i32, %c0_i32_0 : i32, i32
  }
  func.func @transform_7(%arg0: i32) -> (i32, i32) {
    %c0_i32 = arith.constant 0 : i32
    %c0_i32_0 = arith.constant 0 : i32
    %c0_i32_1 = arith.constant 0 : i32
    return %c0_i32, %c0_i32_0 : i32, i32
  }
}

module attributes {stable_mosaic.version = 11 : i64} {
  func.func @warp_sample_kernel(%arg0: i32, %arg1: i32, %arg2: memref<2x6xf32, #tpu.memory_space<smem>>, %arg3: memref<1x3x256xf32, #tpu.memory_space<vmem>>, %arg4: memref<1x4x384xf32, #tpu.memory_space<vmem>>) attributes {dimension_semantics = [#tpu.dimension_semantics<parallel>, #tpu.dimension_semantics<arbitrary>], iteration_bounds = array<i64: 2, 1>, scalar_prefetch = 0 : i64, scratch_operands = 0 : i64, tpu.core_type = #tpu.core_type<tc>, window_params = [{transform_indices = @transform_0, window_bounds = array<i64: 2, 6>}, {transform_indices = @transform_1, window_bounds = array<i64: 1, 3, 256>}, {transform_indices = @transform_2, window_bounds = array<i64: 1, 4, 384>}]} {
    %0 = arith.index_cast %arg0 : i32 to index
    %c0 = arith.constant 0 : index
    %1 = memref.load %arg2[%0, %c0] : memref<2x6xf32, #tpu.memory_space<smem>>
    %2 = arith.index_cast %arg0 : i32 to index
    %c1 = arith.constant 1 : index
    %3 = memref.load %arg2[%2, %c1] : memref<2x6xf32, #tpu.memory_space<smem>>
    %4 = arith.index_cast %arg0 : i32 to index
    %c2 = arith.constant 2 : index
    %5 = memref.load %arg2[%4, %c2] : memref<2x6xf32, #tpu.memory_space<smem>>
    %6 = arith.index_cast %arg0 : i32 to index
    %c3 = arith.constant 3 : index
    %7 = memref.load %arg2[%6, %c3] : memref<2x6xf32, #tpu.memory_space<smem>>
    %8 = arith.index_cast %arg0 : i32 to index
    %c4 = arith.constant 4 : index
    %9 = memref.load %arg2[%8, %c4] : memref<2x6xf32, #tpu.memory_space<smem>>
    %10 = arith.index_cast %arg0 : i32 to index
    %c5 = arith.constant 5 : index
    %11 = memref.load %arg2[%10, %c5] : memref<2x6xf32, #tpu.memory_space<smem>>
    %12 = tpu.iota {dimensions = array<i32: 1>} : vector<1x384xi32>
    %c384_i32 = arith.constant 384 : i32
    %13 = arith.muli %arg1, %c384_i32 : i32
    %14 = vector.broadcast %13 : i32 to vector<1x384xi32>
    %15 = arith.addi %12, %14 : vector<1x384xi32>
    %16 = arith.sitofp %15 : vector<1x384xi32> to vector<1x384xf32>
    %cst = arith.constant 2.000000e+01 : f32
    %17 = vector.broadcast %cst : f32 to vector<1x384xf32>
    %18 = arith.divf %16, %17 : vector<1x384xf32>
    %19 = math.floor %18 : vector<1x384xf32>
    %cst_0 = arith.constant 2.000000e+01 : f32
    %20 = vector.broadcast %cst_0 : f32 to vector<1x384xf32>
    %21 = arith.mulf %19, %20 : vector<1x384xf32>
    %22 = arith.subf %16, %21 : vector<1x384xf32>
    %cst_1 = arith.constant 2.000000e+00 : f32
    %23 = vector.broadcast %cst_1 : f32 to vector<1x384xf32>
    %24 = arith.mulf %23, %22 : vector<1x384xf32>
    %cst_2 = arith.constant 1.000000e+00 : f32
    %25 = vector.broadcast %cst_2 : f32 to vector<1x384xf32>
    %26 = arith.addf %24, %25 : vector<1x384xf32>
    %cst_3 = arith.constant 2.000000e+01 : f32
    %27 = vector.broadcast %cst_3 : f32 to vector<1x384xf32>
    %28 = arith.divf %26, %27 : vector<1x384xf32>
    %cst_4 = arith.constant 1.000000e+00 : f32
    %29 = vector.broadcast %cst_4 : f32 to vector<1x384xf32>
    %30 = arith.subf %28, %29 : vector<1x384xf32>
    %cst_5 = arith.constant 2.000000e+00 : f32
    %31 = vector.broadcast %cst_5 : f32 to vector<1x384xf32>
    %32 = arith.mulf %31, %19 : vector<1x384xf32>
    %cst_6 = arith.constant 1.000000e+00 : f32
    %33 = vector.broadcast %cst_6 : f32 to vector<1x384xf32>
    %34 = arith.addf %32, %33 : vector<1x384xf32>
    %cst_7 = arith.constant 1.800000e+01 : f32
    %35 = vector.broadcast %cst_7 : f32 to vector<1x384xf32>
    %36 = arith.divf %34, %35 : vector<1x384xf32>
    %cst_8 = arith.constant 1.000000e+00 : f32
    %37 = vector.broadcast %cst_8 : f32 to vector<1x384xf32>
    %38 = arith.subf %36, %37 : vector<1x384xf32>
    %39 = vector.broadcast %1 : f32 to vector<1x384xf32>
    %40 = arith.mulf %39, %30 : vector<1x384xf32>
    %41 = vector.broadcast %3 : f32 to vector<1x384xf32>
    %42 = arith.mulf %41, %38 : vector<1x384xf32>
    %43 = arith.addf %40, %42 : vector<1x384xf32>
    %44 = vector.broadcast %5 : f32 to vector<1x384xf32>
    %45 = arith.addf %43, %44 : vector<1x384xf32>
    %46 = vector.broadcast %7 : f32 to vector<1x384xf32>
    %47 = arith.mulf %46, %30 : vector<1x384xf32>
    %48 = vector.broadcast %9 : f32 to vector<1x384xf32>
    %49 = arith.mulf %48, %38 : vector<1x384xf32>
    %50 = arith.addf %47, %49 : vector<1x384xf32>
    %51 = vector.broadcast %11 : f32 to vector<1x384xf32>
    %52 = arith.addf %50, %51 : vector<1x384xf32>
    %cst_9 = arith.constant 1.000000e+00 : f32
    %53 = vector.broadcast %cst_9 : f32 to vector<1x384xf32>
    %54 = arith.addf %45, %53 : vector<1x384xf32>
    %cst_10 = arith.constant 2.000000e+01 : f32
    %55 = vector.broadcast %cst_10 : f32 to vector<1x384xf32>
    %56 = arith.mulf %54, %55 : vector<1x384xf32>
    %cst_11 = arith.constant 1.000000e+00 : f32
    %57 = vector.broadcast %cst_11 : f32 to vector<1x384xf32>
    %58 = arith.subf %56, %57 : vector<1x384xf32>
    %cst_12 = arith.constant 5.000000e-01 : f32
    %59 = vector.broadcast %cst_12 : f32 to vector<1x384xf32>
    %60 = arith.mulf %58, %59 : vector<1x384xf32>
    %cst_13 = arith.constant 1.000000e+00 : f32
    %61 = vector.broadcast %cst_13 : f32 to vector<1x384xf32>
    %62 = arith.addf %52, %61 : vector<1x384xf32>
    %cst_14 = arith.constant 1.800000e+01 : f32
    %63 = vector.broadcast %cst_14 : f32 to vector<1x384xf32>
    %64 = arith.mulf %62, %63 : vector<1x384xf32>
    %cst_15 = arith.constant 1.000000e+00 : f32
    %65 = vector.broadcast %cst_15 : f32 to vector<1x384xf32>
    %66 = arith.subf %64, %65 : vector<1x384xf32>
    %cst_16 = arith.constant 5.000000e-01 : f32
    %67 = vector.broadcast %cst_16 : f32 to vector<1x384xf32>
    %68 = arith.mulf %66, %67 : vector<1x384xf32>
    %69 = math.floor %60 : vector<1x384xf32>
    %70 = math.floor %68 : vector<1x384xf32>
    %71 = arith.subf %60, %69 : vector<1x384xf32>
    %cst_17 = arith.constant 1.000000e+00 : f32
    %72 = vector.broadcast %cst_17 : f32 to vector<1x384xf32>
    %73 = arith.subf %72, %71 : vector<1x384xf32>
    %74 = arith.subf %68, %70 : vector<1x384xf32>
    %cst_18 = arith.constant 1.000000e+00 : f32
    %75 = vector.broadcast %cst_18 : f32 to vector<1x384xf32>
    %76 = arith.subf %75, %74 : vector<1x384xf32>
    %77 = arith.fptosi %69 : vector<1x384xf32> to vector<1x384xi32>
    %78 = arith.fptosi %70 : vector<1x384xf32> to vector<1x384xi32>
    %c1_i32 = arith.constant 1 : i32
    %79 = vector.broadcast %c1_i32 : i32 to vector<1x384xi32>
    %80 = arith.addi %77, %79 : vector<1x384xi32>
    %c1_i32_19 = arith.constant 1 : i32
    %81 = vector.broadcast %c1_i32_19 : i32 to vector<1x384xi32>
    %82 = arith.addi %78, %81 : vector<1x384xi32>
    %83 = arith.mulf %76, %73 : vector<1x384xf32>
    %c0_i32 = arith.constant 0 : i32
    %84 = vector.broadcast %c0_i32 : i32 to vector<1x384xi32>
    %85 = arith.cmpi sge, %78, %84 : vector<1x384xi32>
    %c16_i32 = arith.constant 16 : i32
    %86 = vector.broadcast %c16_i32 : i32 to vector<1x384xi32>
    %87 = arith.cmpi slt, %78, %86 : vector<1x384xi32>
    %88 = arith.andi %85, %87 : vector<1x384xi1>
    %c0_i32_20 = arith.constant 0 : i32
    %89 = vector.broadcast %c0_i32_20 : i32 to vector<1x384xi32>
    %90 = arith.cmpi sge, %77, %89 : vector<1x384xi32>
    %91 = arith.andi %88, %90 : vector<1x384xi1>
    %c16_i32_21 = arith.constant 16 : i32
    %92 = vector.broadcast %c16_i32_21 : i32 to vector<1x384xi32>
    %93 = arith.cmpi slt, %77, %92 : vector<1x384xi32>
    %94 = arith.andi %91, %93 : vector<1x384xi1>
    %cst_22 = arith.constant 0.000000e+00 : f32
    %95 = vector.broadcast %cst_22 : f32 to vector<1x384xf32>
    %96 = arith.select %94, %83, %95 : vector<1x384xi1>, vector<1x384xf32>
    %97 = arith.mulf %76, %71 : vector<1x384xf32>
    %c0_i32_23 = arith.constant 0 : i32
    %98 = vector.broadcast %c0_i32_23 : i32 to vector<1x384xi32>
    %99 = arith.cmpi sge, %78, %98 : vector<1x384xi32>
    %c16_i32_24 = arith.constant 16 : i32
    %100 = vector.broadcast %c16_i32_24 : i32 to vector<1x384xi32>
    %101 = arith.cmpi slt, %78, %100 : vector<1x384xi32>
    %102 = arith.andi %99, %101 : vector<1x384xi1>
    %c0_i32_25 = arith.constant 0 : i32
    %103 = vector.broadcast %c0_i32_25 : i32 to vector<1x384xi32>
    %104 = arith.cmpi sge, %80, %103 : vector<1x384xi32>
    %105 = arith.andi %102, %104 : vector<1x384xi1>
    %c16_i32_26 = arith.constant 16 : i32
    %106 = vector.broadcast %c16_i32_26 : i32 to vector<1x384xi32>
    %107 = arith.cmpi slt, %80, %106 : vector<1x384xi32>
    %108 = arith.andi %105, %107 : vector<1x384xi1>
    %cst_27 = arith.constant 0.000000e+00 : f32
    %109 = vector.broadcast %cst_27 : f32 to vector<1x384xf32>
    %110 = arith.select %108, %97, %109 : vector<1x384xi1>, vector<1x384xf32>
    %111 = arith.mulf %74, %73 : vector<1x384xf32>
    %c0_i32_28 = arith.constant 0 : i32
    %112 = vector.broadcast %c0_i32_28 : i32 to vector<1x384xi32>
    %113 = arith.cmpi sge, %82, %112 : vector<1x384xi32>
    %c16_i32_29 = arith.constant 16 : i32
    %114 = vector.broadcast %c16_i32_29 : i32 to vector<1x384xi32>
    %115 = arith.cmpi slt, %82, %114 : vector<1x384xi32>
    %116 = arith.andi %113, %115 : vector<1x384xi1>
    %c0_i32_30 = arith.constant 0 : i32
    %117 = vector.broadcast %c0_i32_30 : i32 to vector<1x384xi32>
    %118 = arith.cmpi sge, %77, %117 : vector<1x384xi32>
    %119 = arith.andi %116, %118 : vector<1x384xi1>
    %c16_i32_31 = arith.constant 16 : i32
    %120 = vector.broadcast %c16_i32_31 : i32 to vector<1x384xi32>
    %121 = arith.cmpi slt, %77, %120 : vector<1x384xi32>
    %122 = arith.andi %119, %121 : vector<1x384xi1>
    %cst_32 = arith.constant 0.000000e+00 : f32
    %123 = vector.broadcast %cst_32 : f32 to vector<1x384xf32>
    %124 = arith.select %122, %111, %123 : vector<1x384xi1>, vector<1x384xf32>
    %125 = arith.mulf %74, %71 : vector<1x384xf32>
    %c0_i32_33 = arith.constant 0 : i32
    %126 = vector.broadcast %c0_i32_33 : i32 to vector<1x384xi32>
    %127 = arith.cmpi sge, %82, %126 : vector<1x384xi32>
    %c16_i32_34 = arith.constant 16 : i32
    %128 = vector.broadcast %c16_i32_34 : i32 to vector<1x384xi32>
    %129 = arith.cmpi slt, %82, %128 : vector<1x384xi32>
    %130 = arith.andi %127, %129 : vector<1x384xi1>
    %c0_i32_35 = arith.constant 0 : i32
    %131 = vector.broadcast %c0_i32_35 : i32 to vector<1x384xi32>
    %132 = arith.cmpi sge, %80, %131 : vector<1x384xi32>
    %133 = arith.andi %130, %132 : vector<1x384xi1>
    %c16_i32_36 = arith.constant 16 : i32
    %134 = vector.broadcast %c16_i32_36 : i32 to vector<1x384xi32>
    %135 = arith.cmpi slt, %80, %134 : vector<1x384xi32>
    %136 = arith.andi %133, %135 : vector<1x384xi1>
    %cst_37 = arith.constant 0.000000e+00 : f32
    %137 = vector.broadcast %cst_37 : f32 to vector<1x384xf32>
    %138 = arith.select %136, %125, %137 : vector<1x384xi1>, vector<1x384xf32>
    %139 = arith.addf %96, %110 : vector<1x384xf32>
    %140 = arith.addf %139, %124 : vector<1x384xf32>
    %141 = arith.addf %140, %138 : vector<1x384xf32>
    %c0_38 = arith.constant 0 : index
    %c3_39 = arith.constant 3 : index
    %c0_40 = arith.constant 0 : index
    %142 = vector.load %arg4[%c0_38, %c3_39, %c0_40] : memref<1x4x384xf32, #tpu.memory_space<vmem>>, vector<1x1x384xf32>
    %143 = vector.shape_cast %142 : vector<1x1x384xf32> to vector<1x384xf32>
    %144 = vector.shape_cast %141 : vector<1x384xf32> to vector<1x1x384xf32>
    tpu.vector_store %arg4[%c0_38, %c3_39, %c0_40], %144 {strides = array<i32>} : memref<1x4x384xf32, #tpu.memory_space<vmem>>, vector<1x1x384xf32>,
    %c16_i32_41 = arith.constant 16 : i32
    %145 = vector.broadcast %c16_i32_41 : i32 to vector<1x384xi32>
    %146 = arith.muli %78, %145 : vector<1x384xi32>
    %147 = arith.addi %146, %77 : vector<1x384xi32>
    %148 = tpu.iota {dimensions = array<i32: 0>} : vector<256x1xi32>
    %c0_i32_42 = arith.constant 0 : i32
    %149 = vector.broadcast %c0_i32_42 : i32 to vector<256x1xi32>
    %150 = arith.addi %148, %149 : vector<256x1xi32>
    %151 = vector.broadcast %150 : vector<256x1xi32> to vector<256x384xi32>
    %152 = vector.broadcast %147 : vector<1x384xi32> to vector<256x384xi32>
    %153 = arith.subi %151, %152 : vector<256x384xi32>
    %c0_i32_43 = arith.constant 0 : i32
    %154 = vector.broadcast %c0_i32_43 : i32 to vector<256x384xi32>
    %155 = arith.cmpi eq, %153, %154 : vector<256x384xi32>
    %cst_44 = arith.constant 0.000000e+00 : f32
    %156 = vector.shape_cast %96 : vector<1x384xf32> to vector<1x384xf32>
    %157 = vector.broadcast %156 : vector<1x384xf32> to vector<256x384xf32>
    %158 = vector.broadcast %cst_44 : f32 to vector<256x384xf32>
    %159 = arith.select %155, %157, %158 : vector<256x384xi1>, vector<256x384xf32>
    %c1_i32_45 = arith.constant 1 : i32
    %160 = vector.broadcast %c1_i32_45 : i32 to vector<256x384xi32>
    %161 = arith.cmpi eq, %153, %160 : vector<256x384xi32>
    %cst_46 = arith.constant 0.000000e+00 : f32
    %162 = vector.shape_cast %110 : vector<1x384xf32> to vector<1x384xf32>
    %163 = vector.broadcast %162 : vector<1x384xf32> to vector<256x384xf32>
    %164 = vector.broadcast %cst_46 : f32 to vector<256x384xf32>
    %165 = arith.select %161, %163, %164 : vector<256x384xi1>, vector<256x384xf32>
    %166 = arith.addf %159, %165 : vector<256x384xf32>
    %c16_i32_47 = arith.constant 16 : i32
    %167 = vector.broadcast %c16_i32_47 : i32 to vector<256x384xi32>
    %168 = arith.cmpi eq, %153, %167 : vector<256x384xi32>
    %cst_48 = arith.constant 0.000000e+00 : f32
    %169 = vector.shape_cast %124 : vector<1x384xf32> to vector<1x384xf32>
    %170 = vector.broadcast %169 : vector<1x384xf32> to vector<256x384xf32>
    %171 = vector.broadcast %cst_48 : f32 to vector<256x384xf32>
    %172 = arith.select %168, %170, %171 : vector<256x384xi1>, vector<256x384xf32>
    %173 = arith.addf %166, %172 : vector<256x384xf32>
    %c17_i32 = arith.constant 17 : i32
    %174 = vector.broadcast %c17_i32 : i32 to vector<256x384xi32>
    %175 = arith.cmpi eq, %153, %174 : vector<256x384xi32>
    %cst_49 = arith.constant 0.000000e+00 : f32
    %176 = vector.shape_cast %138 : vector<1x384xf32> to vector<1x384xf32>
    %177 = vector.broadcast %176 : vector<1x384xf32> to vector<256x384xf32>
    %178 = vector.broadcast %cst_49 : f32 to vector<256x384xf32>
    %179 = arith.select %175, %177, %178 : vector<256x384xi1>, vector<256x384xf32>
    %180 = arith.addf %173, %179 : vector<256x384xf32>
    %c0_50 = arith.constant 0 : index
    %c0_51 = arith.constant 0 : index
    %c0_52 = arith.constant 0 : index
    %181 = vector.load %arg3[%c0_50, %c0_51, %c0_52] : memref<1x3x256xf32, #tpu.memory_space<vmem>>, vector<1x3x256xf32>
    %182 = vector.shape_cast %181 : vector<1x3x256xf32> to vector<3x256xf32>
    %cst_53 = arith.constant dense<0.000000e+00> : vector<3x384xf32>
    %183 = tpu.matmul %182, %180, %cst_53 {dimension_numbers = #tpu.dot_dimension_numbers<[1], [0], [0], [1], [0, 0, 1, 1], [], []>} : vector<3x256xf32>, vector<256x384xf32>, vector<3x384xf32> -> vector<3x384xf32>
    %c0_54 = arith.constant 0 : index
    %c0_55 = arith.constant 0 : index
    %c0_56 = arith.constant 0 : index
    %184 = vector.load %arg4[%c0_54, %c0_55, %c0_56] : memref<1x4x384xf32, #tpu.memory_space<vmem>>, vector<1x3x384xf32>
    %185 = vector.shape_cast %184 : vector<1x3x384xf32> to vector<3x384xf32>
    %186 = vector.shape_cast %183 : vector<3x384xf32> to vector<1x3x384xf32>
    tpu.vector_store %arg4[%c0_54, %c0_55, %c0_56], %186 {strides = array<i32>} : memref<1x4x384xf32, #tpu.memory_space<vmem>>, vector<1x3x384xf32>,
    return
  }
  func.func @transform_0(%arg0: i32, %arg1: i32) -> (i32, i32) {
    %c0_i32 = arith.constant 0 : i32
    %c0_i32_0 = arith.constant 0 : i32
    %c0_i32_1 = arith.constant 0 : i32
    return %c0_i32, %c0_i32_0 : i32, i32
  }
  func.func @transform_1(%arg0: i32, %arg1: i32) -> (i32, i32, i32) {
    %c0_i32 = arith.constant 0 : i32
    %c0_i32_0 = arith.constant 0 : i32
    %c0_i32_1 = arith.constant 0 : i32
    return %arg0, %c0_i32, %c0_i32_0 : i32, i32, i32
  }
  func.func @transform_2(%arg0: i32, %arg1: i32) -> (i32, i32, i32) {
    %c0_i32 = arith.constant 0 : i32
    %c0_i32_0 = arith.constant 0 : i32
    return %arg0, %c0_i32, %arg1 : i32, i32, i32
  }
}

</mosaic_0001>

<llo_original>
// kernel: _lambda_.2
$region0: #{_lambda_.2}
  #allocation0 [shape = 'u32[]', space=smem, size = 0x4, offset = 0x4, fixed_abs, tag = 'smem constant byte address 0x4 - core index']
  #allocation1 [shape = 'u32[72,128]{1,0:T(1,128)}', space=vmem, size = 0x9000, scoped, tag = 'internal scratch']
  #allocation2 [shape = 'f32[2,64]{1,0:T(2,128)}', space=vmem, size = 0x400, scoped, tag = 'scratch operand']
  %s0 = inlined_call_operand.vmem [shape: f32[2,768], index: 0, kind: input, shape index: {}]
  %s1 = inlined_call_operand.vmem [shape: f32[768,64], index: 1, kind: input, shape index: {}]
  %s2 = inlined_call_operand.vmem [shape: f32[1,64], index: 2, kind: input, shape index: {}]
  %s3 = inlined_call_operand.vmem [shape: f32[64,32], index: 3, kind: input, shape index: {}]
  %s4 = inlined_call_operand.vmem [shape: f32[1,32], index: 4, kind: input, shape index: {}]
  %s5 = inlined_call_operand.vmem [shape: f32[32,6], index: 5, kind: input, shape index: {}]
  %s6 = inlined_call_operand.vmem [shape: f32[1,6], index: 6, kind: input, shape index: {}]
  %s7 = inlined_call_operand.vmem [shape: f32[2,6], index: 7, kind: output, shape index: {}]
  %s8 = sld [smem:[#allocation0]]
  $region46: #{_lambda_.2} parent=0
    _
  %s10 = ssub.s32 1, %s8
  %s11 = scalar_select 0, %s10, %s8
  // Predicated region
  $region2: #{_lambda_.2} parent=0 // pred_check
    _
  $region3: #{_lambda_.2} parent=0 // pred_check_branch
    %13 = sbr.rel (0) target = $region5
  $region4: #{_lambda_.2} parent=0 // pred_region
    _
  $region5: #{_lambda_.2} parent=0 // pred_fallthru
    _
  // Predicated region
  $region6: #{_lambda_.2} parent=0 // pred_check
    _
  $region7: #{_lambda_.2} parent=0 // pred_check_branch
    %15 = sbr.rel (0) target = $region9
  $region8: #{_lambda_.2} parent=0 // pred_region
    _
  $region9: #{_lambda_.2} parent=0 // pred_fallthru
    _
  // Predicated region
  $region10: #{_lambda_.2} parent=0 // pred_check
    _
  $region11: #{_lambda_.2} parent=0 // pred_check_branch
    %17 = sbr.rel (0) target = $region13
  $region12: #{_lambda_.2} parent=0 // pred_region
    _
  $region13: #{_lambda_.2} parent=0 // pred_fallthru
    _
  // Predicated region
  $region14: #{_lambda_.2} parent=0 // pred_check
    _
  $region15: #{_lambda_.2} parent=0 // pred_check_branch
    %19 = sbr.rel (0) target = $region17
  $region16: #{_lambda_.2} parent=0 // pred_region
    _
  $region17: #{_lambda_.2} parent=0 // pred_fallthru
    _
  // Predicated region
  $region18: #{_lambda_.2} parent=0 // pred_check
    _
  $region19: #{_lambda_.2} parent=0 // pred_check_branch
    %21 = sbr.rel (0) target = $region21
  $region20: #{_lambda_.2} parent=0 // pred_region
    _
  $region21: #{_lambda_.2} parent=0 // pred_fallthru
    _
  // Predicated region
  $region22: #{_lambda_.2} parent=0 // pred_check
    _
  $region23: #{_lambda_.2} parent=0 // pred_check_branch
    %23 = sbr.rel (0) target = $region25
  $region24: #{_lambda_.2} parent=0 // pred_region
    _
  $region25: #{_lambda_.2} parent=0 // pred_fallthru
    _
  // Predicated region
  $region26: #{_lambda_.2} parent=0 // pred_check
    _
  $region27: #{_lambda_.2} parent=0 // pred_check_branch
    %25 = sbr.rel (0) target = $region29
  $region28: #{_lambda_.2} parent=0 // pred_region
    _
  $region29: #{_lambda_.2} parent=0 // pred_fallthru
    _
  %p26 = scmp.eq.s32.totalorder 0, 0
  // Predicated region
  $region30: #{_lambda_.2} parent=0 // pred_check
    %p27 = pneg %p26
  $region31: #{_lambda_.2} parent=0 // pred_check_branch
    %29 = sbr.rel (%p27) target = $region33
  $region32: #{_lambda_.2} parent=0 // pred_region
    %vm30 = vcmask 517120
    %31 = vst.msk [vmem:[#allocation2] sm:$0x3] %vm30, 0.0
  $region33: #{_lambda_.2} parent=0 // pred_fallthru
    _
  %v32 = vld [vmem:[#allocation2] sm:$0x3]
  %v33 = vld [vmem:[%s0] sm:$0xff]
  %v34 = vld [vmem:[%s0 + $0x8] sm:$0xf]
  %v35 = vld [vmem:[%s1] sm:$0xff]
  %v36 = vld [vmem:[%s1 + $0x8] sm:$0xff]
  %v37 = vld [vmem:[%s1 + $0x10] sm:$0xff]
  %v38 = vld [vmem:[%s1 + $0x18] sm:$0xff]
  %v39 = vld [vmem:[%s1 + $0x20] sm:$0xff]
  %v40 = vld [vmem:[%s1 + $0x28] sm:$0xff]
  %v41 = vld [vmem:[%s1 + $0x30] sm:$0xff]
  %v42 = vld [vmem:[%s1 + $0x38] sm:$0xff]
  %v43 = vld [vmem:[%s1 + $0x40] sm:$0xff]
  %v44 = vld [vmem:[%s1 + $0x48] sm:$0xff]
  %v45 = vld [vmem:[%s1 + $0x50] sm:$0xff]
  %v46 = vld [vmem:[%s1 + $0x58] sm:$0xff]
  %v47 = vld [vmem:[%s1 + $0x60] sm:$0xff]
  %v48 = vld [vmem:[%s1 + $0x68] sm:$0xff]
  %v49 = vld [vmem:[%s1 + $0x70] sm:$0xff]
  %v50 = vld [vmem:[%s1 + $0x78] sm:$0xff]
  %v51 = vld [vmem:[%s1 + $0x80] sm:$0xff]
  %v52 = vld [vmem:[%s1 + $0x88] sm:$0xff]
  %v53 = vld [vmem:[%s1 + $0x90] sm:$0xff]
  %v54 = vld [vmem:[%s1 + $0x98] sm:$0xff]
  %v55 = vld [vmem:[%s1 + $0xa0] sm:$0xff]
  %v56 = vld [vmem:[%s1 + $0xa8] sm:$0xff]
  %v57 = vld [vmem:[%s1 + $0xb0] sm:$0xff]
  %v58 = vld [vmem:[%s1 + $0xb8] sm:$0xff]
  %v59 = vld [vmem:[%s1 + $0xc0] sm:$0xff]
  %v60 = vld [vmem:[%s1 + $0xc8] sm:$0xff]
  %v61 = vld [vmem:[%s1 + $0xd0] sm:$0xff]
  %v62 = vld [vmem:[%s1 + $0xd8] sm:$0xff]
  %v63 = vld [vmem:[%s1 + $0xe0] sm:$0xff]
  %v64 = vld [vmem:[%s1 + $0xe8] sm:$0xff]
  %v65 = vld [vmem:[%s1 + $0xf0] sm:$0xff]
  %v66 = vld [vmem:[%s1 + $0xf8] sm:$0xff]
  %v67 = vld [vmem:[%s1 + $0x100] sm:$0xff]
  %v68 = vld [vmem:[%s1 + $0x108] sm:$0xff]
  %v69 = vld [vmem:[%s1 + $0x110] sm:$0xff]
  %v70 = vld [vmem:[%s1 + $0x118] sm:$0xff]
  %v71 = vld [vmem:[%s1 + $0x120] sm:$0xff]
  %v72 = vld [vmem:[%s1 + $0x128] sm:$0xff]
  %v73 = vld [vmem:[%s1 + $0x130] sm:$0xff]
  %v74 = vld [vmem:[%s1 + $0x138] sm:$0xff]
  %v75 = vld [vmem:[%s1 + $0x140] sm:$0xff]
  %v76 = vld [vmem:[%s1 + $0x148] sm:$0xff]
  %v77 = vld [vmem:[%s1 + $0x150] sm:$0xff]
  %v78 = vld [vmem:[%s1 + $0x158] sm:$0xff]
  %v79 = vld [vmem:[%s1 + $0x160] sm:$0xff]
  %v80 = vld [vmem:[%s1 + $0x168] sm:$0xff]
  %v81 = vld [vmem:[%s1 + $0x170] sm:$0xff]
  %v82 = vld [vmem:[%s1 + $0x178] sm:$0xff]
  %v83 = vld [vmem:[%s1 + $0x180] sm:$0xff]
  %v84 = vld [vmem:[%s1 + $0x188] sm:$0xff]
  %v85 = vld [vmem:[%s1 + $0x190] sm:$0xff]
  %v86 = vld [vmem:[%s1 + $0x198] sm:$0xff]
  %v87 = vld [vmem:[%s1 + $0x1a0] sm:$0xff]
  %v88 = vld [vmem:[%s1 + $0x1a8] sm:$0xff]
  %v89 = vld [vmem:[%s1 + $0x1b0] sm:$0xff]
  %v90 = vld [vmem:[%s1 + $0x1b8] sm:$0xff]
  %v91 = vld [vmem:[%s1 + $0x1c0] sm:$0xff]
  %v92 = vld [vmem:[%s1 + $0x1c8] sm:$0xff]
  %v93 = vld [vmem:[%s1 + $0x1d0] sm:$0xff]
  %v94 = vld [vmem:[%s1 + $0x1d8] sm:$0xff]
  %v95 = vld [vmem:[%s1 + $0x1e0] sm:$0xff]
  %v96 = vld [vmem:[%s1 + $0x1e8] sm:$0xff]
  %v97 = vld [vmem:[%s1 + $0x1f0] sm:$0xff]
  %v98 = vld [vmem:[%s1 + $0x1f8] sm:$0xff]
  %v99 = vld [vmem:[%s1 + $0x200] sm:$0xff]
  %v100 = vld [vmem:[%s1 + $0x208] sm:$0xff]
  %v101 = vld [vmem:[%s1 + $0x210] sm:$0xff]
  %v102 = vld [vmem:[%s1 + $0x218] sm:$0xff]
  %v103 = vld [vmem:[%s1 + $0x220] sm:$0xff]
  %v104 = vld [vmem:[%s1 + $0x228] sm:$0xff]
  %v105 = vld [vmem:[%s1 + $0x230] sm:$0xff]
  %v106 = vld [vmem:[%s1 + $0x238] sm:$0xff]
  %v107 = vld [vmem:[%s1 + $0x240] sm:$0xff]
  %v108 = vld [vmem:[%s1 + $0x248] sm:$0xff]
  %v109 = vld [vmem:[%s1 + $0x250] sm:$0xff]
  %v110 = vld [vmem:[%s1 + $0x258] sm:$0xff]
  %v111 = vld [vmem:[%s1 + $0x260] sm:$0xff]
  %v112 = vld [vmem:[%s1 + $0x268] sm:$0xff]
  %v113 = vld [vmem:[%s1 + $0x270] sm:$0xff]
  %v114 = vld [vmem:[%s1 + $0x278] sm:$0xff]
  %v115 = vld [vmem:[%s1 + $0x280] sm:$0xff]
  %v116 = vld [vmem:[%s1 + $0x288] sm:$0xff]
  %v117 = vld [vmem:[%s1 + $0x290] sm:$0xff]
  %v118 = vld [vmem:[%s1 + $0x298] sm:$0xff]
  %v119 = vld [vmem:[%s1 + $0x2a0] sm:$0xff]
  %v120 = vld [vmem:[%s1 + $0x2a8] sm:$0xff]
  %v121 = vld [vmem:[%s1 + $0x2b0] sm:$0xff]
  %v122 = vld [vmem:[%s1 + $0x2b8] sm:$0xff]
  %v123 = vld [vmem:[%s1 + $0x2c0] sm:$0xff]
  %v124 = vld [vmem:[%s1 + $0x2c8] sm:$0xff]
  %v125 = vld [vmem:[%s1 + $0x2d0] sm:$0xff]
  %v126 = vld [vmem:[%s1 + $0x2d8] sm:$0xff]
  %v127 = vld [vmem:[%s1 + $0x2e0] sm:$0xff]
  %v128 = vld [vmem:[%s1 + $0x2e8] sm:$0xff]
  %v129 = vld [vmem:[%s1 + $0x2f0] sm:$0xff]
  %v130 = vld [vmem:[%s1 + $0x2f8] sm:$0xff]
  %133 = vst [vmem:[#allocation1] ss:$4 sm:$0xff] %v33
  %s134 = scalar_lea.vmem [#allocation1], 32
  %135 = vst [vmem:[%s134] ss:$4 sm:$0xff] %v34
  %v136 = vld.sshfl [vmem:[#allocation1] sm:$0xff pattern:$0x73625140]
  %v137 = vld.sshfl [vmem:[#allocation1 + $0x8] sm:$0xff pattern:$0x73625140]
  %v138 = vld.sshfl [vmem:[#allocation1 + $0x10] sm:$0xff pattern:$0x73625140]
  %v139 = vld.sshfl [vmem:[#allocation1 + $0x18] sm:$0xff pattern:$0x73625140]
  %v140 = vld.sshfl [vmem:[#allocation1 + $0x20] sm:$0xff pattern:$0x73625140]
  %v141 = vld.sshfl [vmem:[#allocation1 + $0x28] sm:$0xff pattern:$0x73625140]
  %148 = vmatpush.msra.mxu0 %v50
  %149 = vmatpush.msra.mxu0 %v49
  %150 = vmatpush.msra.mxu0 %v48
  %151 = vmatpush.msra.mxu0 %v47
  %152 = vmatpush.msra.mxu0 %v46
  %153 = vmatpush.msra.mxu0 %v45
  %154 = vmatpush.msra.mxu0 %v44
  %155 = vmatpush.msra.mxu0 %v43
  %156 = vmatpush.msra.mxu0 %v42
  %157 = vmatpush.msra.mxu0 %v41
  %158 = vmatpush.msra.mxu0 %v40
  %159 = vmatpush.msra.mxu0 %v39
  %160 = vmatpush.msra.mxu0 %v38
  %161 = vmatpush.msra.mxu0 %v37
  %162 = vmatpush.msra.mxu0 %v36
  %163 = vmatpush.msra.mxu0 %v35
  %164 = vmatmul.f32.gmra.mxu0 %v136
  %v165 = vpop.f32.mrf.mxu0
  %v166 = vadd.f32 0.0, %v165
  %167 = vdwg.mxu0
  %168 = vmatpush.msra.mxu0 %v66
  %169 = vmatpush.msra.mxu0 %v65
  %170 = vmatpush.msra.mxu0 %v64
  %171 = vmatpush.msra.mxu0 %v63
  %172 = vmatpush.msra.mxu0 %v62
  %173 = vmatpush.msra.mxu0 %v61
  %174 = vmatpush.msra.mxu0 %v60
  %175 = vmatpush.msra.mxu0 %v59
  %176 = vmatpush.msra.mxu0 %v58
  %177 = vmatpush.msra.mxu0 %v57
  %178 = vmatpush.msra.mxu0 %v56
  %179 = vmatpush.msra.mxu0 %v55
  %180 = vmatpush.msra.mxu0 %v54
  %181 = vmatpush.msra.mxu0 %v53
  %182 = vmatpush.msra.mxu0 %v52
  %183 = vmatpush.msra.mxu0 %v51
  %184 = vmatmul.f32.gmra.mxu0 %v137
  %v185 = vpop.f32.mrf.mxu0
  %v186 = vadd.f32 %v166, %v185
  %187 = vdwg.mxu0
  %188 = vmatpush.msra.mxu0 %v82
  %189 = vmatpush.msra.mxu0 %v81
  %190 = vmatpush.msra.mxu0 %v80
  %191 = vmatpush.msra.mxu0 %v79
  %192 = vmatpush.msra.mxu0 %v78
  %193 = vmatpush.msra.mxu0 %v77
  %194 = vmatpush.msra.mxu0 %v76
  %195 = vmatpush.msra.mxu0 %v75
  %196 = vmatpush.msra.mxu0 %v74
  %197 = vmatpush.msra.mxu0 %v73
  %198 = vmatpush.msra.mxu0 %v72
  %199 = vmatpush.msra.mxu0 %v71
  %200 = vmatpush.msra.mxu0 %v70
  %201 = vmatpush.msra.mxu0 %v69
  %202 = vmatpush.msra.mxu0 %v68
  %203 = vmatpush.msra.mxu0 %v67
  %204 = vmatmul.f32.gmra.mxu0 %v138
  %v205 = vpop.f32.mrf.mxu0
  %v206 = vadd.f32 %v186, %v205
  %207 = vdwg.mxu0
  %208 = vmatpush.msra.mxu0 %v98
  %209 = vmatpush.msra.mxu0 %v97
  %210 = vmatpush.msra.mxu0 %v96
  %211 = vmatpush.msra.mxu0 %v95
  %212 = vmatpush.msra.mxu0 %v94
  %213 = vmatpush.msra.mxu0 %v93
  %214 = vmatpush.msra.mxu0 %v92
  %215 = vmatpush.msra.mxu0 %v91
  %216 = vmatpush.msra.mxu0 %v90
  %217 = vmatpush.msra.mxu0 %v89
  %218 = vmatpush.msra.mxu0 %v88
  %219 = vmatpush.msra.mxu0 %v87
  %220 = vmatpush.msra.mxu0 %v86
  %221 = vmatpush.msra.mxu0 %v85
  %222 = vmatpush.msra.mxu0 %v84
  %223 = vmatpush.msra.mxu0 %v83
  %224 = vmatmul.f32.gmra.mxu0 %v139
  %v225 = vpop.f32.mrf.mxu0
  %v226 = vadd.f32 %v206, %v225
  %227 = vdwg.mxu0
  %228 = vmatpush.msra.mxu0 %v114
  %229 = vmatpush.msra.mxu0 %v113
  %230 = vmatpush.msra.mxu0 %v112
  %231 = vmatpush.msra.mxu0 %v111
  %232 = vmatpush.msra.mxu0 %v110
  %233 = vmatpush.msra.mxu0 %v109
  %234 = vmatpush.msra.mxu0 %v108
  %235 = vmatpush.msra.mxu0 %v107
  %236 = vmatpush.msra.mxu0 %v106
  %237 = vmatpush.msra.mxu0 %v105
  %238 = vmatpush.msra.mxu0 %v104
  %239 = vmatpush.msra.mxu0 %v103
  %240 = vmatpush.msra.mxu0 %v102
  %241 = vmatpush.msra.mxu0 %v101
  %242 = vmatpush.msra.mxu0 %v100
  %243 = vmatpush.msra.mxu0 %v99
  %244 = vmatmul.f32.gmra.mxu0 %v140
  %v245 = vpop.f32.mrf.mxu0
  %v246 = vadd.f32 %v226, %v245
  %247 = vdwg.mxu0
  %248 = vmatpush.msra.mxu0 %v130
  %249 = vmatpush.msra.mxu0 %v129
  %250 = vmatpush.msra.mxu0 %v128
  %251 = vmatpush.msra.mxu0 %v127
  %252 = vmatpush.msra.mxu0 %v126
  %253 = vmatpush.msra.mxu0 %v125
  %254 = vmatpush.msra.mxu0 %v124
  %255 = vmatpush.msra.mxu0 %v123
  %256 = vmatpush.msra.mxu0 %v122
  %257 = vmatpush.msra.mxu0 %v121
  %258 = vmatpush.msra.mxu0 %v120
  %259 = vmatpush.msra.mxu0 %v119
  %260 = vmatpush.msra.mxu0 %v118
  %261 = vmatpush.msra.mxu0 %v117
  %262 = vmatpush.msra.mxu0 %v116
  %263 = vmatpush.msra.mxu0 %v115
  %264 = vmatmul.f32.gmra.mxu0 %v141
  %v265 = vpop.f32.mrf.mxu0
  %v266 = vadd.f32 %v246, %v265
  %267 = vdwg.mxu0
  %v268 = vadd.f32 %v32, %v266
  %vm269 = vcmask 517120
  %270 = vst.msk [vmem:[#allocation2] sm:$0x3] %vm269, %v268
  // Predicated region
  $region34: #{_lambda_.2} parent=0 // pred_check
    %p271 = pneg %p26
  $region35: #{_lambda_.2} parent=0 // pred_check_branch
    %273 = sbr.rel (%p271) target = $region37
  $region36: #{_lambda_.2} parent=0 // pred_region
    %v274 = vld [vmem:[#allocation2] sm:$0x3]
    %v275 = vld [vmem:[%s2] sm:$0x1]
    %v277 = vperm.slane %v275, 0
    %v279 = vadd.f32 %v274, %v277
    %v280 = vmax.f32 %v279, 0.0
    %v281 = vld [vmem:[%s3] sm:$0xff]
    %v282 = vld [vmem:[%s3 + $0x8] sm:$0xff]
    %v283 = vld [vmem:[%s3 + $0x10] sm:$0xff]
    %v284 = vld [vmem:[%s3 + $0x18] sm:$0xff]
    %v285 = vld [vmem:[%s3 + $0x20] sm:$0xff]
    %v286 = vld [vmem:[%s3 + $0x28] sm:$0xff]
    %v287 = vld [vmem:[%s3 + $0x30] sm:$0xff]
    %v288 = vld [vmem:[%s3 + $0x38] sm:$0xff]
    %v289 = vld [vmem:[%s4] sm:$0x1]
    %v291 = vperm.slane %v289, 0
    %vm293 = vcmask 523264
    %v295 = vsel %vm293, %v280, 0
    %297 = vmatpush.msra.mxu0 0.0
    %298 = vmatpush.msra.mxu0 0.0
    %299 = vmatpush.msra.mxu0 0.0
    %300 = vmatpush.msra.mxu0 0.0
    %301 = vmatpush.msra.mxu0 0.0
    %302 = vmatpush.msra.mxu0 0.0
    %303 = vmatpush.msra.mxu0 0.0
    %304 = vmatpush.msra.mxu0 0.0
    %305 = vmatpush.msra.mxu0 %v288
    %306 = vmatpush.msra.mxu0 %v287
    %307 = vmatpush.msra.mxu0 %v286
    %308 = vmatpush.msra.mxu0 %v285
    %309 = vmatpush.msra.mxu0 %v284
    %310 = vmatpush.msra.mxu0 %v283
    %311 = vmatpush.msra.mxu0 %v282
    %312 = vmatpush.msra.mxu0 %v281
    %313 = vmatmul.f32.gmra.mxu0 %v295
    %v314 = vpop.f32.mrf.mxu0
    %v315 = vadd.f32 %v291, %v314
    %316 = vdwg.mxu0
    %v317 = vmax.f32 %v315, 0.0
    %v318 = vld [vmem:[%s5] sm:$0xff]
    %v319 = vld [vmem:[%s5 + $0x8] sm:$0xff]
    %v320 = vld [vmem:[%s5 + $0x10] sm:$0xff]
    %v321 = vld [vmem:[%s5 + $0x18] sm:$0xff]
    %v322 = vld [vmem:[%s6] sm:$0x1]
    %v324 = vperm.slane %v322, 0
    %vm326 = vcmask 261120
    %v328 = vsel %vm326, %v317, 0
    %330 = vmatpush.msra.mxu0 0.0
    %331 = vmatpush.msra.mxu0 0.0
    %332 = vmatpush.msra.mxu0 0.0
    %333 = vmatpush.msra.mxu0 0.0
    %334 = vmatpush.msra.mxu0 0.0
    %335 = vmatpush.msra.mxu0 0.0
    %336 = vmatpush.msra.mxu0 0.0
    %337 = vmatpush.msra.mxu0 0.0
    %338 = vmatpush.msra.mxu0 0.0
    %339 = vmatpush.msra.mxu0 0.0
    %340 = vmatpush.msra.mxu0 0.0
    %341 = vmatpush.msra.mxu0 0.0
    %342 = vmatpush.msra.mxu0 %v321
    %343 = vmatpush.msra.mxu0 %v320
    %344 = vmatpush.msra.mxu0 %v319
    %345 = vmatpush.msra.mxu0 %v318
    %346 = vmatmul.f32.gmra.mxu0 %v328
    %v347 = vpop.f32.mrf.mxu0
    %v348 = vadd.f32 %v324, %v347
    %349 = vdwg.mxu0
    %vm350 = vcmask 41984
    %351 = vst.msk [vmem:[%s7] sm:$0x3] %vm350, %v348
  $region37: #{_lambda_.2} parent=0 // pred_fallthru
    _
  // Predicated region
  $region38: #{_lambda_.2} parent=0 // pred_check
    _
  $region39: #{_lambda_.2} parent=0 // pred_check_branch
    %353 = sbr.rel (0) target = $region41
  $region40: #{_lambda_.2} parent=0 // pred_region
    _
  $region41: #{_lambda_.2} parent=0 // pred_fallthru
    _
  // Predicated region
  $region42: #{_lambda_.2} parent=0 // pred_check
    _
  $region43: #{_lambda_.2} parent=0 // pred_check_branch
    %355 = sbr.rel (0) target = $region45
  $region44: #{_lambda_.2} parent=0 // pred_region
    _
  $region45: #{_lambda_.2} parent=0 // pred_fallthru
    _

// kernel: _lambda_.3
$region0: #{_lambda_.3}
  #allocation0 [shape = 'u32[]', space=smem, size = 0x4, offset = 0x4, fixed_abs, tag = 'smem constant byte address 0x4 - core index']
  #allocation1 [shape = 'u32[72,128]{1,0:T(1,128)}', space=vmem, size = 0x9000, scoped, tag = 'internal scratch']
  %s0 = inlined_call_operand.vmem [shape: f32[2,6], index: 0, kind: input, shape index: {}]
  %s1 = inlined_call_operand.vmem [shape: f32[2,3,256], index: 1, kind: input, shape index: {}]
  %s2 = inlined_call_operand.vmem [shape: f32[2,4,384], index: 2, kind: output, shape index: {}]
  %s3 = sld [smem:[#allocation0]]
  $region45: #{_lambda_.3} parent=0
    _
  %s5 = ssub.s32 1, %s3
  %s6 = scalar_select 0, %s5, %s3
  $region1: #{_lambda_.3} parent=0
    #allocation2 [shape = 'u8[1024]{0}', space=smem, size = 0x400, scoped, tag = 'input window, operand 0, single buffered']
    #allocation3 [shape = 's32[2]{0}', space=sflag, size = 0x8, scoped, tag = 'scoped memory for _lambda_.3']
    %7 = vsyncpa [#allocation3], 0
    loop: start=0, step=1, limit=4
    $region2: #{_lambda_.3} parent=1 // loop_pre_header
      _
    $region3: #{_lambda_.3} parent=1 // loop_header
      %s9 = sphi 0, %s13
      %p10 = scmp.ge.s32.totalorder %s9, 4
      %s16 = sphi 0, %s28
      %s17 = sphi 0, %s24
      %s18 = sphi 0, %s16
      %s19 = sphi 0, %s17
      %s20 = sphi 0, %s18
      %s21 = sphi 0, %s19
      %s29 = sphi 0, %s29
      %s31 = sphi 0, %s29
      %s32 = sphi 0, %s31
      %s46 = sphi 0, %s32
      %s52 = sphi 0, %s54
      %s55 = sphi 0, %s52
      %s56 = sphi 0, %s55
      %s72 = sphi 0, %s56
      %s80 = sphi 0, %s82
      %s83 = sphi 0, %s80
      %s84 = sphi 0, %s83
      %s100 = sphi 0, %s84
    $region4: #{_lambda_.3} parent=1 // loop_header_branch
      %12 = sbr.rel (%p10) target = $region8
    $region5: #{_lambda_.3} parent=1 // loop_body
      %s14 = ssub.s32 %s9, 1
      %s15 = ssub.s32 %s9, 2
      %s22 = sadd.s32 1, %s17
      %p23 = scmp.ge.s32.totalorder %s22, 1
      %s24 = scalar_select %p23, 0, %s22
      %s25 = sadd.s32 1, %s16
      %s26 = scalar_select %p23, %s25, %s16
      %p27 = scmp.ge.s32.totalorder %s26, 2
      %s28 = scalar_select %p27, 0, %s26
      %s30 = sadd.s32 %s29, 1
      %p33 = scmp.eq.s32.totalorder %s9, 1
      %p34 = scmp.ne.s32.totalorder %s29, %s31
      %p35 = scmp.eq.s32.totalorder %s9, 0
      %p36 = por %p34, %p35
      %p37 = scmp.ne.s32.totalorder %s29, %s31
      %p38 = scmp.eq.s32.totalorder %s14, 1
      %p39 = por %p37, %p38
      %p40 = scmp.ne.s32.totalorder %s31, %s32
      %p41 = scmp.eq.s32.totalorder %s14, 0
      %p42 = por %p40, %p41
      %p43 = scmp.ne.s32.totalorder %s31, %s32
      %p44 = scmp.eq.s32.totalorder %s15, 1
      %p45 = por %p43, %p44
      %p47 = scmp.ne.s32.totalorder %s32, %s46
      %p48 = scmp.eq.s32.totalorder %s15, 0
      %p49 = por %p47, %p48
      %s50 = ssub.s32 %s16, %s28
      %p51 = scmp.eq.s32.totalorder %s50, 0
      %s53 = sadd.s32 %s52, 1
      %s54 = scalar_select %p51, %s52, %s53
      %p57 = pneg %p51
      %p58 = scmp.eq.s32.totalorder %s9, 1
      %p59 = por %p57, %p58
      %p60 = scmp.ne.s32.totalorder %s52, %s55
      %p61 = scmp.eq.s32.totalorder %s9, 0
      %p62 = por %p60, %p61
      %p63 = scmp.ne.s32.totalorder %s52, %s55
      %p64 = scmp.eq.s32.totalorder %s14, 1
      %p65 = por %p63, %p64
      %p66 = scmp.ne.s32.totalorder %s55, %s56
      %p67 = scmp.eq.s32.totalorder %s14, 0
      %p68 = por %p66, %p67
      %p69 = scmp.ne.s32.totalorder %s55, %s56
      %p70 = scmp.eq.s32.totalorder %s15, 1
      %p71 = por %p69, %p70
      %p73 = scmp.ne.s32.totalorder %s56, %s72
      %p74 = scmp.eq.s32.totalorder %s15, 0
      %p75 = por %p73, %p74
      %s76 = ssub.s32 %s16, %s28
      %s77 = ssub.s32 %s17, %s24
      %s78 = sor.u32 %s76, %s77
      %p79 = scmp.eq.s32.totalorder %s78, 0
      %s81 = sadd.s32 %s80, 1
      %s82 = scalar_select %p79, %s80, %s81
      %p85 = pneg %p79
      %p86 = scmp.eq.s32.totalorder %s9, 1
      %p87 = por %p85, %p86
      %p88 = scmp.ne.s32.totalorder %s80, %s83
      %p89 = scmp.eq.s32.totalorder %s9, 0
      %p90 = por %p88, %p89
      %p91 = scmp.ne.s32.totalorder %s80, %s83
      %p92 = scmp.eq.s32.totalorder %s14, 1
      %p93 = por %p91, %p92
      %p94 = scmp.ne.s32.totalorder %s83, %s84
      %p95 = scmp.eq.s32.totalorder %s14, 0
      %p96 = por %p94, %p95
      %p97 = scmp.ne.s32.totalorder %s83, %s84
      %p98 = scmp.eq.s32.totalorder %s15, 1
      %p99 = por %p97, %p98
      %p101 = scmp.ne.s32.totalorder %s84, %s100
      %p102 = scmp.eq.s32.totalorder %s15, 0
      %p103 = por %p101, %p102
      %p104 = scmp.le.s32.totalorder 1, %s9
      %p105 = scmp.lt.s32.totalorder %s9, 3
      %p106 = pnand %p104, %p105
      %p107 = pneg %p106
      // Predicated region
      $region9: #{_lambda_.3} parent=5 // pred_check
        _
      $region10: #{_lambda_.3} parent=5 // pred_check_branch
        %109 = sbr.rel (%p106) target = $region12
      $region11: #{_lambda_.3} parent=5 // pred_region
        %s110 = ssub.s32 %s9, 1
        // Predicated region
        $region13: #{_lambda_.3} parent=11 // pred_check
          %p111 = pneg %p42
        $region14: #{_lambda_.3} parent=11 // pred_check_branch
          %113 = sbr.rel (%p111) target = $region16
        $region15: #{_lambda_.3} parent=11 // pred_region
          %115 = vsyncadd [#allocation3], 0
          %s117 = sshll.u32 %s0, 4
          %s118 = int_to_ptr.vmem [resolvable:$true] %s117
          %120 = dma.vmem_to_smem %s118, 32, [#allocation2], [#allocation3]
        $region16: #{_lambda_.3} parent=11 // pred_fallthru
          _
      $region12: #{_lambda_.3} parent=5 // pred_fallthru
        _
      %p121 = scmp.lt.s32.totalorder %s9, 2
      // Predicated region
      $region17: #{_lambda_.3} parent=5 // pred_check
        %p122 = pneg %p121
      $region18: #{_lambda_.3} parent=5 // pred_check_branch
        %124 = sbr.rel (%p122) target = $region20
      $region19: #{_lambda_.3} parent=5 // pred_region
        // Predicated region
        $region21: #{_lambda_.3} parent=19 // pred_check
          %p125 = pneg %p62
        $region22: #{_lambda_.3} parent=19 // pred_check_branch
          %127 = sbr.rel (%p125) target = $region24
        $region23: #{_lambda_.3} parent=19 // pred_region
          %p128 = scmp.lt.s32.totalorder %s16, 1
          %s129 = scalar_select %p128, %s16, 1
          %s130 = smul.addr %s129, 2
          %s131 = smul.addr %s130, 4
          %s132 = scalar_lea.vmem %s1, %s131
        $region24: #{_lambda_.3} parent=19 // pred_fallthru
          _
      $region20: #{_lambda_.3} parent=5 // pred_fallthru
        _
      %p133 = scmp.le.s32.totalorder 1, %s9
      %p134 = scmp.lt.s32.totalorder %s9, 3
      %p135 = pnand %p133, %p134
      %p136 = pneg %p135
      // Predicated region
      $region25: #{_lambda_.3} parent=5 // pred_check
        _
      $region26: #{_lambda_.3} parent=5 // pred_check_branch
        %138 = sbr.rel (%p135) target = $region28
      $region27: #{_lambda_.3} parent=5 // pred_region
        %s139 = ssub.s32 %s9, 1
        // Predicated region
        $region29: #{_lambda_.3} parent=27 // pred_check
          %p140 = pneg %p42
        $region30: #{_lambda_.3} parent=27 // pred_check_branch
          %142 = sbr.rel (%p140) target = $region32
        $region31: #{_lambda_.3} parent=27 // pred_region
          %144 = dma.done [#allocation3], 32
        $region32: #{_lambda_.3} parent=27 // pred_fallthru
          _
        %145 = sfence
        %p146 = pneg %p42
        %p147 = pneg %p39
        %p148 = scmp.lt.s32.totalorder %s18, 1
        %s149 = scalar_select %p148, %s18, 1
        %s150 = smul.addr %s149, 2
        %s151 = smul.addr %s150, 4
        %s152 = scalar_lea.vmem %s1, %s151
        %p153 = pneg %p68
        %p154 = pneg %p65
        %p155 = pneg %p96
        %p156 = pneg %p93
        %s157 = smul.u32 3, %s19
        %p158 = scmp.lt.s32.totalorder %s18, 1
        %s159 = scalar_select %p158, %s18, 1
        %p160 = scmp.lt.s32.totalorder %s157, 2
        %s161 = scalar_select %p160, %s157, 2
        %s162 = smul.addr %s159, 3
        %s163 = sadd.s32 %s161, %s162
        %s164 = smul.addr %s163, 4
        %s165 = scalar_lea.vmem %s2, %s164
        %p166 = scmp.lt.s32.totalorder %s18, 1
        %s167 = scalar_select %p166, %s18, 1
        %s168 = smul.addr %s167, 2
        %s169 = smul.addr %s168, 4
        %s170 = scalar_lea.vmem %s1, %s169
        %s171 = smul.u32 3, %s19
        %p172 = scmp.lt.s32.totalorder %s18, 1
        %s173 = scalar_select %p172, %s18, 1
        %p174 = scmp.lt.s32.totalorder %s171, 2
        %s175 = scalar_select %p174, %s171, 2
        %s176 = smul.addr %s173, 3
        %s177 = sadd.s32 %s175, %s176
        %s178 = smul.addr %s177, 4
        %s179 = scalar_lea.vmem %s2, %s178
        %s180 = smul.u32 3, %s19
        %s181 = smul.u32 %s18, 128
        %s182 = sld [smem:[#allocation2 + %s181]]
        %s183 = sadd.s32 %s181, 1
        %s184 = sld [smem:[#allocation2 + %s183]]
        %s185 = sadd.s32 %s181, 2
        %s186 = sld [smem:[#allocation2 + %s185]]
        %s187 = sadd.s32 %s181, 3
        %s188 = sld [smem:[#allocation2 + %s187]]
        %s189 = sadd.s32 %s181, 4
        %s190 = sld [smem:[#allocation2 + %s189]]
        %s191 = sadd.s32 %s181, 5
        %s192 = sld [smem:[#allocation2 + %s191]]
        %v193 = vlaneseq
        %v194 = vand.u32 %v193, 127
        %v195 = vadd.s32 %v194, 128
        %v196 = vadd.s32 %v194, 256
        %s197 = smul.u32 %s19, 384
        %v198 = vstv %s197
        %v199 = vadd.s32 %v194, %v198
        %v200 = vadd.s32 %v195, %v198
        %v201 = vadd.s32 %v196, %v198
        %v202 = vcvt.s32.f32 %v199
        %v203 = vcvt.s32.f32 %v200
        %v204 = vcvt.s32.f32 %v201
        %v205 = vrcp.pop 20.0
        %v206 = vmul.f32 20.0, %v205
        %v207 = vsub.f32 1.0, %v206
        %v208 = vmul.f32 %v205, %v207
        %v209 = vadd.f32 %v205, %v208
        %vm210 = vweird.f32 %v205
        %v211 = vsel %vm210, %v205, %v209
        %v212 = vmul.f32 %v202, %v211
        %v213 = vmul.f32 %v203, %v211
        %v214 = vmul.f32 %v204, %v211
        %v215 = vfloor.f32 %v212
        %v216 = vfloor.f32 %v213
        %v217 = vfloor.f32 %v214
        %v218 = vmul.f32 %v215, 20.0
        %v219 = vmul.f32 %v216, 20.0
        %v220 = vmul.f32 %v217, 20.0
        %v221 = vsub.f32 %v202, %v218
        %v222 = vsub.f32 %v203, %v219
        %v223 = vsub.f32 %v204, %v220
        %v224 = vmul.f32 %v221, 2.0
        %v225 = vmul.f32 %v222, 2.0
        %v226 = vmul.f32 %v223, 2.0
        %v227 = vadd.f32 %v224, 1.0
        %v228 = vadd.f32 %v225, 1.0
        %v229 = vadd.f32 %v226, 1.0
        %v230 = vmul.f32 %v227, %v211
        %v231 = vmul.f32 %v228, %v211
        %v232 = vmul.f32 %v229, %v211
        %v233 = vsub.f32 %v230, 1.0
        %v234 = vsub.f32 %v231, 1.0
        %v235 = vsub.f32 %v232, 1.0
        %v236 = vmul.f32 %v215, 2.0
        %v237 = vmul.f32 %v216, 2.0
        %v238 = vmul.f32 %v217, 2.0
        %v239 = vadd.f32 %v236, 1.0
        %v240 = vadd.f32 %v237, 1.0
        %v241 = vadd.f32 %v238, 1.0
        %v242 = vrcp.pop 18.0
        %v243 = vmul.f32 18.0, %v242
        %v244 = vsub.f32 1.0, %v243
        %v245 = vmul.f32 %v242, %v244
        %v246 = vadd.f32 %v242, %v245
        %vm247 = vweird.f32 %v242
        %v248 = vsel %vm247, %v242, %v246
        %v249 = vmul.f32 %v239, %v248
        %v250 = vmul.f32 %v240, %v248
        %v251 = vmul.f32 %v241, %v248
        %v252 = vsub.f32 %v249, 1.0
        %v253 = vsub.f32 %v250, 1.0
        %v254 = vsub.f32 %v251, 1.0
        %v255 = vstv %s182
        %v256 = vmul.f32 %v255, %v233
        %v257 = vmul.f32 %v255, %v234
        %v258 = vmul.f32 %v255, %v235
        %v259 = vstv %s184
        %v260 = vmul.f32 %v259, %v252
        %v261 = vmul.f32 %v259, %v253
        %v262 = vmul.f32 %v259, %v254
        %v263 = vadd.f32 %v256, %v260
        %v264 = vadd.f32 %v257, %v261
        %v265 = vadd.f32 %v258, %v262
        %v266 = vstv %s186
        %v267 = vadd.f32 %v263, %v266
        %v268 = vadd.f32 %v264, %v266
        %v269 = vadd.f32 %v265, %v266
        %v270 = vstv %s188
        %v271 = vmul.f32 %v270, %v233
        %v272 = vmul.f32 %v270, %v234
        %v273 = vmul.f32 %v270, %v235
        %v274 = vstv %s190
        %v275 = vmul.f32 %v274, %v252
        %v276 = vmul.f32 %v274, %v253
        %v277 = vmul.f32 %v274, %v254
        %v278 = vadd.f32 %v271, %v275
        %v279 = vadd.f32 %v272, %v276
        %v280 = vadd.f32 %v273, %v277
        %v281 = vstv %s192
        %v282 = vadd.f32 %v278, %v281
        %v283 = vadd.f32 %v279, %v281
        %v284 = vadd.f32 %v280, %v281
        %v285 = vadd.f32 %v267, 1.0
        %v286 = vadd.f32 %v268, 1.0
        %v287 = vadd.f32 %v269, 1.0
        %v288 = vmul.f32 %v285, 20.0
        %v289 = vmul.f32 %v286, 20.0
        %v290 = vmul.f32 %v287, 20.0
        %v291 = vsub.f32 %v288, 1.0
        %v292 = vsub.f32 %v289, 1.0
        %v293 = vsub.f32 %v290, 1.0
        %v294 = vmul.f32 %v291, 0.5
        %v295 = vmul.f32 %v292, 0.5
        %v296 = vmul.f32 %v293, 0.5
        %v297 = vadd.f32 %v282, 1.0
        %v298 = vadd.f32 %v283, 1.0
        %v299 = vadd.f32 %v284, 1.0
        %v300 = vmul.f32 %v297, 18.0
        %v301 = vmul.f32 %v298, 18.0
        %v302 = vmul.f32 %v299, 18.0
        %v303 = vsub.f32 %v300, 1.0
        %v304 = vsub.f32 %v301, 1.0
        %v305 = vsub.f32 %v302, 1.0
        %v306 = vmul.f32 %v303, 0.5
        %v307 = vmul.f32 %v304, 0.5
        %v308 = vmul.f32 %v305, 0.5
        %v309 = vfloor.f32 %v294
        %v310 = vfloor.f32 %v295
        %v311 = vfloor.f32 %v296
        %v312 = vfloor.f32 %v306
        %v313 = vfloor.f32 %v307
        %v314 = vfloor.f32 %v308
        %v315 = vsub.f32 %v294, %v309
        %v316 = vsub.f32 %v295, %v310
        %v317 = vsub.f32 %v296, %v311
        %v318 = vsub.f32 1.0, %v315
        %v319 = vsub.f32 1.0, %v316
        %v320 = vsub.f32 1.0, %v317
        %v321 = vsub.f32 %v306, %v312
        %v322 = vsub.f32 %v307, %v313
        %v323 = vsub.f32 %v308, %v314
        %v324 = vsub.f32 1.0, %v321
        %v325 = vsub.f32 1.0, %v322
        %v326 = vsub.f32 1.0, %v323
        %v327 = vcvt.f32.s32.to.zero.pseudo %v309
        %v328 = vcvt.f32.s32.to.zero.pseudo %v310
        %v329 = vcvt.f32.s32.to.zero.pseudo %v311
        %v330 = vcvt.f32.s32.to.zero.pseudo %v312
        %v331 = vcvt.f32.s32.to.zero.pseudo %v313
        %v332 = vcvt.f32.s32.to.zero.pseudo %v314
        %v333 = vadd.s32 %v327, 1
        %v334 = vadd.s32 %v328, 1
        %v335 = vadd.s32 %v329, 1
        %v336 = vadd.s32 %v330, 1
        %v337 = vadd.s32 %v331, 1
        %v338 = vadd.s32 %v332, 1
        %v339 = vmul.f32 %v324, %v318
        %v340 = vmul.f32 %v325, %v319
        %v341 = vmul.f32 %v326, %v320
        %vm342 = vcmp.ge.s32.totalorder %v330, 0
        %vm343 = vcmp.ge.s32.totalorder %v331, 0
        %vm344 = vcmp.ge.s32.totalorder %v332, 0
        %vm345 = vcmp.lt.s32.totalorder %v330, 16
        %vm346 = vcmp.lt.s32.totalorder %v331, 16
        %vm347 = vcmp.lt.s32.totalorder %v332, 16
        %vm348 = vmand %vm342, %vm345
        %vm349 = vmand %vm343, %vm346
        %vm350 = vmand %vm344, %vm347
        %vm351 = vcmp.ge.s32.totalorder %v327, 0
        %vm352 = vcmp.ge.s32.totalorder %v328, 0
        %vm353 = vcmp.ge.s32.totalorder %v329, 0
        %vm354 = vmand %vm348, %vm351
        %vm355 = vmand %vm349, %vm352
        %vm356 = vmand %vm350, %vm353
        %vm357 = vcmp.lt.s32.totalorder %v327, 16
        %vm358 = vcmp.lt.s32.totalorder %v328, 16
        %vm359 = vcmp.lt.s32.totalorder %v329, 16
        %vm360 = vmand %vm354, %vm357
        %vm361 = vmand %vm355, %vm358
        %vm362 = vmand %vm356, %vm359
        %v363 = vsel %vm360, %v339, 0.0
        %v364 = vsel %vm361, %v340, 0.0
        %v365 = vsel %vm362, %v341, 0.0
        %v366 = vmul.f32 %v324, %v315
        %v367 = vmul.f32 %v325, %v316
        %v368 = vmul.f32 %v326, %v317
        %vm369 = vcmp.ge.s32.totalorder %v333, 0
        %vm370 = vcmp.ge.s32.totalorder %v334, 0
        %vm371 = vcmp.ge.s32.totalorder %v335, 0
        %vm372 = vmand %vm348, %vm369
        %vm373 = vmand %vm349, %vm370
        %vm374 = vmand %vm350, %vm371
        %vm375 = vcmp.lt.s32.totalorder %v333, 16
        %vm376 = vcmp.lt.s32.totalorder %v334, 16
        %vm377 = vcmp.lt.s32.totalorder %v335, 16
        %vm378 = vmand %vm372, %vm375
        %vm379 = vmand %vm373, %vm376
        %vm380 = vmand %vm374, %vm377
        %v381 = vsel %vm378, %v366, 0.0
        %v382 = vsel %vm379, %v367, 0.0
        %v383 = vsel %vm380, %v368, 0.0
        %v384 = vmul.f32 %v321, %v318
        %v385 = vmul.f32 %v322, %v319
        %v386 = vmul.f32 %v323, %v320
        %vm387 = vcmp.ge.s32.totalorder %v336, 0
        %vm388 = vcmp.ge.s32.totalorder %v337, 0
        %vm389 = vcmp.ge.s32.totalorder %v338, 0
        %vm390 = vcmp.lt.s32.totalorder %v336, 16
        %vm391 = vcmp.lt.s32.totalorder %v337, 16
        %vm392 = vcmp.lt.s32.totalorder %v338, 16
        %vm393 = vmand %vm387, %vm390
        %vm394 = vmand %vm388, %vm391
        %vm395 = vmand %vm389, %vm392
        %vm396 = vmand %vm393, %vm351
        %vm397 = vmand %vm394, %vm352
        %vm398 = vmand %vm395, %vm353
        %vm399 = vmand %vm396, %vm357
        %vm400 = vmand %vm397, %vm358
        %vm401 = vmand %vm398, %vm359
        %v402 = vsel %vm399, %v384, 0.0
        %v403 = vsel %vm400, %v385, 0.0
        %v404 = vsel %vm401, %v386, 0.0
        %v405 = vmul.f32 %v321, %v315
        %v406 = vmul.f32 %v322, %v316
        %v407 = vmul.f32 %v323, %v317
        %vm408 = vmand %vm393, %vm369
        %vm409 = vmand %vm394, %vm370
        %vm410 = vmand %vm395, %vm371
        %vm411 = vmand %vm408, %vm375
        %vm412 = vmand %vm409, %vm376
        %vm413 = vmand %vm410, %vm377
        %v414 = vsel %vm411, %v405, 0.0
        %v415 = vsel %vm412, %v406, 0.0
        %v416 = vsel %vm413, %v407, 0.0
        %v417 = vadd.f32 %v363, %v381
        %v418 = vadd.f32 %v364, %v382
        %v419 = vadd.f32 %v365, %v383
        %v420 = vadd.f32 %v417, %v402
        %v421 = vadd.f32 %v418, %v403
        %v422 = vadd.f32 %v419, %v404
        %v423 = vadd.f32 %v420, %v414
        %v424 = vadd.f32 %v421, %v415
        %v425 = vadd.f32 %v422, %v416
        %v429 = vrot.slane %v424, 7
        %v430 = vrot.slane %v425, 6
        %vm431 = vcmask 1040384
        %v432 = vsel %vm431, %v423, %v429
        %vm433 = vcmask 1041408
        %v434 = vsel %vm433, %v432, %v430
        %v436 = vlaneseq
        %vm437 = vcmp.ge.s32.totalorder %v436, 0
        %vm438 = vcmp.lt.s32.totalorder %v436, 384
        %vm439 = vmand %vm437, %vm438
        %s440 = scalar_lea.vmem %s179, 3
        %441 = vst.msk [vmem:[%s440] ss:$4 sm:$0x7] %vm439, %v434
        %v442 = vmul.u32 %v330, 16
        %v443 = vmul.u32 %v331, 16
        %v444 = vmul.u32 %v332, 16
        %v445 = vadd.s32 %v442, %v327
        %v446 = vadd.s32 %v443, %v328
        %v447 = vadd.s32 %v444, %v329
        %v448 = vlaneseq
        %v449 = vshrl.u32 %v448, 7
        %v450 = vadd.s32 %v449, 8
        %v451 = vadd.s32 %v449, 16
        %v452 = vadd.s32 %v449, 24
        %v453 = vadd.s32 %v449, 32
        %v454 = vadd.s32 %v449, 40
        %v455 = vadd.s32 %v449, 48
        %v456 = vadd.s32 %v449, 56
        %v457 = vadd.s32 %v449, 64
        %v458 = vadd.s32 %v449, 72
        %v459 = vadd.s32 %v449, 80
        %v460 = vadd.s32 %v449, 88
        %v461 = vadd.s32 %v449, 96
        %v462 = vadd.s32 %v449, 104
        %v463 = vadd.s32 %v449, 112
        %v464 = vadd.s32 %v449, 120
        %v465 = vadd.s32 %v449, 128
        %v466 = vadd.s32 %v449, 136
        %v467 = vadd.s32 %v449, 144
        %v468 = vadd.s32 %v449, 152
        %v469 = vadd.s32 %v449, 160
        %v470 = vadd.s32 %v449, 168
        %v471 = vadd.s32 %v449, 176
        %v472 = vadd.s32 %v449, 184
        %v473 = vadd.s32 %v449, 192
        %v474 = vadd.s32 %v449, 200
        %v475 = vadd.s32 %v449, 208
        %v476 = vadd.s32 %v449, 216
        %v477 = vadd.s32 %v449, 224
        %v478 = vadd.s32 %v449, 232
        %v479 = vadd.s32 %v449, 240
        %v480 = vadd.s32 %v449, 248
        %v481 = vsub.s32 %v449, %v445
        %v482 = vsub.s32 %v449, %v446
        %v483 = vsub.s32 %v449, %v447
        %v484 = vsub.s32 %v450, %v445
        %v485 = vsub.s32 %v450, %v446
        %v486 = vsub.s32 %v450, %v447
        %v487 = vsub.s32 %v451, %v445
        %v488 = vsub.s32 %v451, %v446
        %v489 = vsub.s32 %v451, %v447
        %v490 = vsub.s32 %v452, %v445
        %v491 = vsub.s32 %v452, %v446
        %v492 = vsub.s32 %v452, %v447
        %v493 = vsub.s32 %v453, %v445
        %v494 = vsub.s32 %v453, %v446
        %v495 = vsub.s32 %v453, %v447
        %v496 = vsub.s32 %v454, %v445
        %v497 = vsub.s32 %v454, %v446
        %v498 = vsub.s32 %v454, %v447
        %v499 = vsub.s32 %v455, %v445
        %v500 = vsub.s32 %v455, %v446
        %v501 = vsub.s32 %v455, %v447
        %v502 = vsub.s32 %v456, %v445
        %v503 = vsub.s32 %v456, %v446
        %v504 = vsub.s32 %v456, %v447
        %v505 = vsub.s32 %v457, %v445
        %v506 = vsub.s32 %v457, %v446
        %v507 = vsub.s32 %v457, %v447
        %v508 = vsub.s32 %v458, %v445
        %v509 = vsub.s32 %v458, %v446
        %v510 = vsub.s32 %v458, %v447
        %v511 = vsub.s32 %v459, %v445
        %v512 = vsub.s32 %v459, %v446
        %v513 = vsub.s32 %v459, %v447
        %v514 = vsub.s32 %v460, %v445
        %v515 = vsub.s32 %v460, %v446
        %v516 = vsub.s32 %v460, %v447
        %v517 = vsub.s32 %v461, %v445
        %v518 = vsub.s32 %v461, %v446
        %v519 = vsub.s32 %v461, %v447
        %v520 = vsub.s32 %v462, %v445
        %v521 = vsub.s32 %v462, %v446
        %v522 = vsub.s32 %v462, %v447
        %v523 = vsub.s32 %v463, %v445
        %v524 = vsub.s32 %v463, %v446
        %v525 = vsub.s32 %v463, %v447
        %v526 = vsub.s32 %v464, %v445
        %v527 = vsub.s32 %v464, %v446
        %v528 = vsub.s32 %v464, %v447
        %v529 = vsub.s32 %v465, %v445
        %v530 = vsub.s32 %v465, %v446
        %v531 = vsub.s32 %v465, %v447
        %v532 = vsub.s32 %v466, %v445
        %v533 = vsub.s32 %v466, %v446
        %v534 = vsub.s32 %v466, %v447
        %v535 = vsub.s32 %v467, %v445
        %v536 = vsub.s32 %v467, %v446
        %v537 = vsub.s32 %v467, %v447
        %v538 = vsub.s32 %v468, %v445
        %v539 = vsub.s32 %v468, %v446
        %v540 = vsub.s32 %v468, %v447
        %v541 = vsub.s32 %v469, %v445
        %v542 = vsub.s32 %v469, %v446
        %v543 = vsub.s32 %v469, %v447
        %v544 = vsub.s32 %v470, %v445
        %v545 = vsub.s32 %v470, %v446
        %v546 = vsub.s32 %v470, %v447
        %v547 = vsub.s32 %v471, %v445
        %v548 = vsub.s32 %v471, %v446
        %v549 = vsub.s32 %v471, %v447
        %v550 = vsub.s32 %v472, %v445
        %v551 = vsub.s32 %v472, %v446
        %v552 = vsub.s32 %v472, %v447
        %v553 = vsub.s32 %v473, %v445
        %v554 = vsub.s32 %v473, %v446
        %v555 = vsub.s32 %v473, %v447
        %v556 = vsub.s32 %v474, %v445
        %v557 = vsub.s32 %v474, %v446
        %v558 = vsub.s32 %v474, %v447
        %v559 = vsub.s32 %v475, %v445
        %v560 = vsub.s32 %v475, %v446
        %v561 = vsub.s32 %v475, %v447
        %v562 = vsub.s32 %v476, %v445
        %v563 = vsub.s32 %v476, %v446
        %v564 = vsub.s32 %v476, %v447
        %v565 = vsub.s32 %v477, %v445
        %v566 = vsub.s32 %v477, %v446
        %v567 = vsub.s32 %v477, %v447
        %v568 = vsub.s32 %v478, %v445
        %v569 = vsub.s32 %v478, %v446
        %v570 = vsub.s32 %v478, %v447
        %v571 = vsub.s32 %v479, %v445
        %v572 = vsub.s32 %v479, %v446
        %v573 = vsub.s32 %v479, %v447
        %v574 = vsub.s32 %v480, %v445
        %v575 = vsub.s32 %v480, %v446
        %v576 = vsub.s32 %v480, %v447
        %vm577 = vcmp.eq.s32.totalorder %v481, 0
        %vm578 = vcmp.eq.s32.totalorder %v482, 0
        %vm579 = vcmp.eq.s32.totalorder %v483, 0
        %vm580 = vcmp.eq.s32.totalorder %v484, 0
        %vm581 = vcmp.eq.s32.totalorder %v485, 0
        %vm582 = vcmp.eq.s32.totalorder %v486, 0
        %vm583 = vcmp.eq.s32.totalorder %v487, 0
        %vm584 = vcmp.eq.s32.totalorder %v488, 0
        %vm585 = vcmp.eq.s32.totalorder %v489, 0
        %vm586 = vcmp.eq.s32.totalorder %v490, 0
        %vm587 = vcmp.eq.s32.totalorder %v491, 0
        %vm588 = vcmp.eq.s32.totalorder %v492, 0
        %vm589 = vcmp.eq.s32.totalorder %v493, 0
        %vm590 = vcmp.eq.s32.totalorder %v494, 0
        %vm591 = vcmp.eq.s32.totalorder %v495, 0
        %vm592 = vcmp.eq.s32.totalorder %v496, 0
        %vm593 = vcmp.eq.s32.totalorder %v497, 0
        %vm594 = vcmp.eq.s32.totalorder %v498, 0
        %vm595 = vcmp.eq.s32.totalorder %v499, 0
        %vm596 = vcmp.eq.s32.totalorder %v500, 0
        %vm597 = vcmp.eq.s32.totalorder %v501, 0
        %vm598 = vcmp.eq.s32.totalorder %v502, 0
        %vm599 = vcmp.eq.s32.totalorder %v503, 0
        %vm600 = vcmp.eq.s32.totalorder %v504, 0
        %vm601 = vcmp.eq.s32.totalorder %v505, 0
        %vm602 = vcmp.eq.s32.totalorder %v506, 0
        %vm603 = vcmp.eq.s32.totalorder %v507, 0
        %vm604 = vcmp.eq.s32.totalorder %v508, 0
        %vm605 = vcmp.eq.s32.totalorder %v509, 0
        %vm606 = vcmp.eq.s32.totalorder %v510, 0
        %vm607 = vcmp.eq.s32.totalorder %v511, 0
        %vm608 = vcmp.eq.s32.totalorder %v512, 0
        %vm609 = vcmp.eq.s32.totalorder %v513, 0
        %vm610 = vcmp.eq.s32.totalorder %v514, 0
        %vm611 = vcmp.eq.s32.totalorder %v515, 0
        %vm612 = vcmp.eq.s32.totalorder %v516, 0
        %vm613 = vcmp.eq.s32.totalorder %v517, 0
        %vm614 = vcmp.eq.s32.totalorder %v518, 0
        %vm615 = vcmp.eq.s32.totalorder %v519, 0
        %vm616 = vcmp.eq.s32.totalorder %v520, 0
        %vm617 = vcmp.eq.s32.totalorder %v521, 0
        %vm618 = vcmp.eq.s32.totalorder %v522, 0
        %vm619 = vcmp.eq.s32.totalorder %v523, 0
        %vm620 = vcmp.eq.s32.totalorder %v524, 0
        %vm621 = vcmp.eq.s32.totalorder %v525, 0
        %vm622 = vcmp.eq.s32.totalorder %v526, 0
        %vm623 = vcmp.eq.s32.totalorder %v527, 0
        %vm624 = vcmp.eq.s32.totalorder %v528, 0
        %vm625 = vcmp.eq.s32.totalorder %v529, 0
        %vm626 = vcmp.eq.s32.totalorder %v530, 0
        %vm627 = vcmp.eq.s32.totalorder %v531, 0
        %vm628 = vcmp.eq.s32.totalorder %v532, 0
        %vm629 = vcmp.eq.s32.totalorder %v533, 0
        %vm630 = vcmp.eq.s32.totalorder %v534, 0
        %vm631 = vcmp.eq.s32.totalorder %v535, 0
        %vm632 = vcmp.eq.s32.totalorder %v536, 0
        %vm633 = vcmp.eq.s32.totalorder %v537, 0
        %vm634 = vcmp.eq.s32.totalorder %v538, 0
        %vm635 = vcmp.eq.s32.totalorder %v539, 0
        %vm636 = vcmp.eq.s32.totalorder %v540, 0
        %vm637 = vcmp.eq.s32.totalorder %v541, 0
        %vm638 = vcmp.eq.s32.totalorder %v542, 0
        %vm639 = vcmp.eq.s32.totalorder %v543, 0
        %vm640 = vcmp.eq.s32.totalorder %v544, 0
        %vm641 = vcmp.eq.s32.totalorder %v545, 0
        %vm642 = vcmp.eq.s32.totalorder %v546, 0
        %vm643 = vcmp.eq.s32.totalorder %v547, 0
        %vm644 = vcmp.eq.s32.totalorder %v548, 0
        %vm645 = vcmp.eq.s32.totalorder %v549, 0
        %vm646 = vcmp.eq.s32.totalorder %v550, 0
        %vm647 = vcmp.eq.s32.totalorder %v551, 0
        %vm648 = vcmp.eq.s32.totalorder %v552, 0
        %vm649 = vcmp.eq.s32.totalorder %v553, 0
        %vm650 = vcmp.eq.s32.totalorder %v554, 0
        %vm651 = vcmp.eq.s32.totalorder %v555, 0
        %vm652 = vcmp.eq.s32.totalorder %v556, 0
        %vm653 = vcmp.eq.s32.totalorder %v557, 0
        %vm654 = vcmp.eq.s32.totalorder %v558, 0
        %vm655 = vcmp.eq.s32.totalorder %v559, 0
        %vm656 = vcmp.eq.s32.totalorder %v560, 0
        %vm657 = vcmp.eq.s32.totalorder %v561, 0
        %vm658 = vcmp.eq.s32.totalorder %v562, 0
        %vm659 = vcmp.eq.s32.totalorder %v563, 0
        %vm660 = vcmp.eq.s32.totalorder %v564, 0
        %vm661 = vcmp.eq.s32.totalorder %v565, 0
        %vm662 = vcmp.eq.s32.totalorder %v566, 0
        %vm663 = vcmp.eq.s32.totalorder %v567, 0
        %vm664 = vcmp.eq.s32.totalorder %v568, 0
        %vm665 = vcmp.eq.s32.totalorder %v569, 0
        %vm666 = vcmp.eq.s32.totalorder %v570, 0
        %vm667 = vcmp.eq.s32.totalorder %v571, 0
        %vm668 = vcmp.eq.s32.totalorder %v572, 0
        %vm669 = vcmp.eq.s32.totalorder %v573, 0
        %vm670 = vcmp.eq.s32.totalorder %v574, 0
        %vm671 = vcmp.eq.s32.totalorder %v575, 0
        %vm672 = vcmp.eq.s32.totalorder %v576, 0
        %v673 = vsel %vm577, %v363, 0.0
        %v674 = vsel %vm578, %v364, 0.0
        %v675 = vsel %vm579, %v365, 0.0
        %v676 = vsel %vm580, %v363, 0.0
        %v677 = vsel %vm581, %v364, 0.0
        %v678 = vsel %vm582, %v365, 0.0
        %v679 = vsel %vm583, %v363, 0.0
        %v680 = vsel %vm584, %v364, 0.0
        %v681 = vsel %vm585, %v365, 0.0
        %v682 = vsel %vm586, %v363, 0.0
        %v683 = vsel %vm587, %v364, 0.0
        %v684 = vsel %vm588, %v365, 0.0
        %v685 = vsel %vm589, %v363, 0.0
        %v686 = vsel %vm590, %v364, 0.0
        %v687 = vsel %vm591, %v365, 0.0
        %v688 = vsel %vm592, %v363, 0.0
        %v689 = vsel %vm593, %v364, 0.0
        %v690 = vsel %vm594, %v365, 0.0
        %v691 = vsel %vm595, %v363, 0.0
        %v692 = vsel %vm596, %v364, 0.0
        %v693 = vsel %vm597, %v365, 0.0
        %v694 = vsel %vm598, %v363, 0.0
        %v695 = vsel %vm599, %v364, 0.0
        %v696 = vsel %vm600, %v365, 0.0
        %v697 = vsel %vm601, %v363, 0.0
        %v698 = vsel %vm602, %v364, 0.0
        %v699 = vsel %vm603, %v365, 0.0
        %v700 = vsel %vm604, %v363, 0.0
        %v701 = vsel %vm605, %v364, 0.0
        %v702 = vsel %vm606, %v365, 0.0
        %v703 = vsel %vm607, %v363, 0.0
        %v704 = vsel %vm608, %v364, 0.0
        %v705 = vsel %vm609, %v365, 0.0
        %v706 = vsel %vm610, %v363, 0.0
        %v707 = vsel %vm611, %v364, 0.0
        %v708 = vsel %vm612, %v365, 0.0
        %v709 = vsel %vm613, %v363, 0.0
        %v710 = vsel %vm614, %v364, 0.0
        %v711 = vsel %vm615, %v365, 0.0
        %v712 = vsel %vm616, %v363, 0.0
        %v713 = vsel %vm617, %v364, 0.0
        %v714 = vsel %vm618, %v365, 0.0
        %v715 = vsel %vm619, %v363, 0.0
        %v716 = vsel %vm620, %v364, 0.0
        %v717 = vsel %vm621, %v365, 0.0
        %v718 = vsel %vm622, %v363, 0.0
        %v719 = vsel %vm623, %v364, 0.0
        %v720 = vsel %vm624, %v365, 0.0
        %v721 = vsel %vm625, %v363, 0.0
        %v722 = vsel %vm626, %v364, 0.0
        %v723 = vsel %vm627, %v365, 0.0
        %v724 = vsel %vm628, %v363, 0.0
        %v725 = vsel %vm629, %v364, 0.0
        %v726 = vsel %vm630, %v365, 0.0
        %v727 = vsel %vm631, %v363, 0.0
        %v728 = vsel %vm632, %v364, 0.0
        %v729 = vsel %vm633, %v365, 0.0
        %v730 = vsel %vm634, %v363, 0.0
        %v731 = vsel %vm635, %v364, 0.0
        %v732 = vsel %vm636, %v365, 0.0
        %v733 = vsel %vm637, %v363, 0.0
        %v734 = vsel %vm638, %v364, 0.0
        %v735 = vsel %vm639, %v365, 0.0
        %v736 = vsel %vm640, %v363, 0.0
        %v737 = vsel %vm641, %v364, 0.0
        %v738 = vsel %vm642, %v365, 0.0
        %v739 = vsel %vm643, %v363, 0.0
        %v740 = vsel %vm644, %v364, 0.0
        %v741 = vsel %vm645, %v365, 0.0
        %v742 = vsel %vm646, %v363, 0.0
        %v743 = vsel %vm647, %v364, 0.0
        %v744 = vsel %vm648, %v365, 0.0
        %v745 = vsel %vm649, %v363, 0.0
        %v746 = vsel %vm650, %v364, 0.0
        %v747 = vsel %vm651, %v365, 0.0
        %v748 = vsel %vm652, %v363, 0.0
        %v749 = vsel %vm653, %v364, 0.0
        %v750 = vsel %vm654, %v365, 0.0
        %v751 = vsel %vm655, %v363, 0.0
        %v752 = vsel %vm656, %v364, 0.0
        %v753 = vsel %vm657, %v365, 0.0
        %v754 = vsel %vm658, %v363, 0.0
        %v755 = vsel %vm659, %v364, 0.0
        %v756 = vsel %vm660, %v365, 0.0
        %v757 = vsel %vm661, %v363, 0.0
        %v758 = vsel %vm662, %v364, 0.0
        %v759 = vsel %vm663, %v365, 0.0
        %v760 = vsel %vm664, %v363, 0.0
        %v761 = vsel %vm665, %v364, 0.0
        %v762 = vsel %vm666, %v365, 0.0
        %v763 = vsel %vm667, %v363, 0.0
        %v764 = vsel %vm668, %v364, 0.0
        %v765 = vsel %vm669, %v365, 0.0
        %v766 = vsel %vm670, %v363, 0.0
        %v767 = vsel %vm671, %v364, 0.0
        %v768 = vsel %vm672, %v365, 0.0
        %vm769 = vcmp.eq.s32.totalorder %v481, 1
        %vm770 = vcmp.eq.s32.totalorder %v482, 1
        %vm771 = vcmp.eq.s32.totalorder %v483, 1
        %vm772 = vcmp.eq.s32.totalorder %v484, 1
        %vm773 = vcmp.eq.s32.totalorder %v485, 1
        %vm774 = vcmp.eq.s32.totalorder %v486, 1
        %vm775 = vcmp.eq.s32.totalorder %v487, 1
        %vm776 = vcmp.eq.s32.totalorder %v488, 1
        %vm777 = vcmp.eq.s32.totalorder %v489, 1
        %vm778 = vcmp.eq.s32.totalorder %v490, 1
        %vm779 = vcmp.eq.s32.totalorder %v491, 1
        %vm780 = vcmp.eq.s32.totalorder %v492, 1
        %vm781 = vcmp.eq.s32.totalorder %v493, 1
        %vm782 = vcmp.eq.s32.totalorder %v494, 1
        %vm783 = vcmp.eq.s32.totalorder %v495, 1
        %vm784 = vcmp.eq.s32.totalorder %v496, 1
        %vm785 = vcmp.eq.s32.totalorder %v497, 1
        %vm786 = vcmp.eq.s32.totalorder %v498, 1
        %vm787 = vcmp.eq.s32.totalorder %v499, 1
        %vm788 = vcmp.eq.s32.totalorder %v500, 1
        %vm789 = vcmp.eq.s32.totalorder %v501, 1
        %vm790 = vcmp.eq.s32.totalorder %v502, 1
        %vm791 = vcmp.eq.s32.totalorder %v503, 1
        %vm792 = vcmp.eq.s32.totalorder %v504, 1
        %vm793 = vcmp.eq.s32.totalorder %v505, 1
        %vm794 = vcmp.eq.s32.totalorder %v506, 1
        %vm795 = vcmp.eq.s32.totalorder %v507, 1
        %vm796 = vcmp.eq.s32.totalorder %v508, 1
        %vm797 = vcmp.eq.s32.totalorder %v509, 1
        %vm798 = vcmp.eq.s32.totalorder %v510, 1
        %vm799 = vcmp.eq.s32.totalorder %v511, 1
        %vm800 = vcmp.eq.s32.totalorder %v512, 1
        %vm801 = vcmp.eq.s32.totalorder %v513, 1
        %vm802 = vcmp.eq.s32.totalorder %v514, 1
        %vm803 = vcmp.eq.s32.totalorder %v515, 1
        %vm804 = vcmp.eq.s32.totalorder %v516, 1
        %vm805 = vcmp.eq.s32.totalorder %v517, 1
        %vm806 = vcmp.eq.s32.totalorder %v518, 1
        %vm807 = vcmp.eq.s32.totalorder %v519, 1
        %vm808 = vcmp.eq.s32.totalorder %v520, 1
        %vm809 = vcmp.eq.s32.totalorder %v521, 1
        %vm810 = vcmp.eq.s32.totalorder %v522, 1
        %vm811 = vcmp.eq.s32.totalorder %v523, 1
        %vm812 = vcmp.eq.s32.totalorder %v524, 1
        %vm813 = vcmp.eq.s32.totalorder %v525, 1
        %vm814 = vcmp.eq.s32.totalorder %v526, 1
        %vm815 = vcmp.eq.s32.totalorder %v527, 1
        %vm816 = vcmp.eq.s32.totalorder %v528, 1
        %vm817 = vcmp.eq.s32.totalorder %v529, 1
        %vm818 = vcmp.eq.s32.totalorder %v530, 1
        %vm819 = vcmp.eq.s32.totalorder %v531, 1
        %vm820 = vcmp.eq.s32.totalorder %v532, 1
        %vm821 = vcmp.eq.s32.totalorder %v533, 1
        %vm822 = vcmp.eq.s32.totalorder %v534, 1
        %vm823 = vcmp.eq.s32.totalorder %v535, 1
        %vm824 = vcmp.eq.s32.totalorder %v536, 1
        %vm825 = vcmp.eq.s32.totalorder %v537, 1
        %vm826 = vcmp.eq.s32.totalorder %v538, 1
        %vm827 = vcmp.eq.s32.totalorder %v539, 1
        %vm828 = vcmp.eq.s32.totalorder %v540, 1
        %vm829 = vcmp.eq.s32.totalorder %v541, 1
        %vm830 = vcmp.eq.s32.totalorder %v542, 1
        %vm831 = vcmp.eq.s32.totalorder %v543, 1
        %vm832 = vcmp.eq.s32.totalorder %v544, 1
        %vm833 = vcmp.eq.s32.totalorder %v545, 1
        %vm834 = vcmp.eq.s32.totalorder %v546, 1
        %vm835 = vcmp.eq.s32.totalorder %v547, 1
        %vm836 = vcmp.eq.s32.totalorder %v548, 1
        %vm837 = vcmp.eq.s32.totalorder %v549, 1
        %vm838 = vcmp.eq.s32.totalorder %v550, 1
        %vm839 = vcmp.eq.s32.totalorder %v551, 1
        %vm840 = vcmp.eq.s32.totalorder %v552, 1
        %vm841 = vcmp.eq.s32.totalorder %v553, 1
        %vm842 = vcmp.eq.s32.totalorder %v554, 1
        %vm843 = vcmp.eq.s32.totalorder %v555, 1
        %vm844 = vcmp.eq.s32.totalorder %v556, 1
        %vm845 = vcmp.eq.s32.totalorder %v557, 1
        %vm846 = vcmp.eq.s32.totalorder %v558, 1
        %vm847 = vcmp.eq.s32.totalorder %v559, 1
        %vm848 = vcmp.eq.s32.totalorder %v560, 1
        %vm849 = vcmp.eq.s32.totalorder %v561, 1
        %vm850 = vcmp.eq.s32.totalorder %v562, 1
        %vm851 = vcmp.eq.s32.totalorder %v563, 1
        %vm852 = vcmp.eq.s32.totalorder %v564, 1
        %vm853 = vcmp.eq.s32.totalorder %v565, 1
        %vm854 = vcmp.eq.s32.totalorder %v566, 1
        %vm855 = vcmp.eq.s32.totalorder %v567, 1
        %vm856 = vcmp.eq.s32.totalorder %v568, 1
        %vm857 = vcmp.eq.s32.totalorder %v569, 1
        %vm858 = vcmp.eq.s32.totalorder %v570, 1
        %vm859 = vcmp.eq.s32.totalorder %v571, 1
        %vm860 = vcmp.eq.s32.totalorder %v572, 1
        %vm861 = vcmp.eq.s32.totalorder %v573, 1
        %vm862 = vcmp.eq.s32.totalorder %v574, 1
        %vm863 = vcmp.eq.s32.totalorder %v575, 1
        %vm864 = vcmp.eq.s32.totalorder %v576, 1
        %v865 = vsel %vm769, %v381, 0.0
        %v866 = vsel %vm770, %v382, 0.0
        %v867 = vsel %vm771, %v383, 0.0
        %v868 = vsel %vm772, %v381, 0.0
        %v869 = vsel %vm773, %v382, 0.0
        %v870 = vsel %vm774, %v383, 0.0
        %v871 = vsel %vm775, %v381, 0.0
        %v872 = vsel %vm776, %v382, 0.0
        %v873 = vsel %vm777, %v383, 0.0
        %v874 = vsel %vm778, %v381, 0.0
        %v875 = vsel %vm779, %v382, 0.0
        %v876 = vsel %vm780, %v383, 0.0
        %v877 = vsel %vm781, %v381, 0.0
        %v878 = vsel %vm782, %v382, 0.0
        %v879 = vsel %vm783, %v383, 0.0
        %v880 = vsel %vm784, %v381, 0.0
        %v881 = vsel %vm785, %v382, 0.0
        %v882 = vsel %vm786, %v383, 0.0
        %v883 = vsel %vm787, %v381, 0.0
        %v884 = vsel %vm788, %v382, 0.0
        %v885 = vsel %vm789, %v383, 0.0
        %v886 = vsel %vm790, %v381, 0.0
        %v887 = vsel %vm791, %v382, 0.0
        %v888 = vsel %vm792, %v383, 0.0
        %v889 = vsel %vm793, %v381, 0.0
        %v890 = vsel %vm794, %v382, 0.0
        %v891 = vsel %vm795, %v383, 0.0
        %v892 = vsel %vm796, %v381, 0.0
        %v893 = vsel %vm797, %v382, 0.0
        %v894 = vsel %vm798, %v383, 0.0
        %v895 = vsel %vm799, %v381, 0.0
        %v896 = vsel %vm800, %v382, 0.0
        %v897 = vsel %vm801, %v383, 0.0
        %v898 = vsel %vm802, %v381, 0.0
        %v899 = vsel %vm803, %v382, 0.0
        %v900 = vsel %vm804, %v383, 0.0
        %v901 = vsel %vm805, %v381, 0.0
        %v902 = vsel %vm806, %v382, 0.0
        %v903 = vsel %vm807, %v383, 0.0
        %v904 = vsel %vm808, %v381, 0.0
        %v905 = vsel %vm809, %v382, 0.0
        %v906 = vsel %vm810, %v383, 0.0
        %v907 = vsel %vm811, %v381, 0.0
        %v908 = vsel %vm812, %v382, 0.0
        %v909 = vsel %vm813, %v383, 0.0
        %v910 = vsel %vm814, %v381, 0.0
        %v911 = vsel %vm815, %v382, 0.0
        %v912 = vsel %vm816, %v383, 0.0
        %v913 = vsel %vm817, %v381, 0.0
        %v914 = vsel %vm818, %v382, 0.0
        %v915 = vsel %vm819, %v383, 0.0
        %v916 = vsel %vm820, %v381, 0.0
        %v917 = vsel %vm821, %v382, 0.0
        %v918 = vsel %vm822, %v383, 0.0
        %v919 = vsel %vm823, %v381, 0.0
        %v920 = vsel %vm824, %v382, 0.0
        %v921 = vsel %vm825, %v383, 0.0
        %v922 = vsel %vm826, %v381, 0.0
        %v923 = vsel %vm827, %v382, 0.0
        %v924 = vsel %vm828, %v383, 0.0
        %v925 = vsel %vm829, %v381, 0.0
        %v926 = vsel %vm830, %v382, 0.0
        %v927 = vsel %vm831, %v383, 0.0
        %v928 = vsel %vm832, %v381, 0.0
        %v929 = vsel %vm833, %v382, 0.0
        %v930 = vsel %vm834, %v383, 0.0
        %v931 = vsel %vm835, %v381, 0.0
        %v932 = vsel %vm836, %v382, 0.0
        %v933 = vsel %vm837, %v383, 0.0
        %v934 = vsel %vm838, %v381, 0.0
        %v935 = vsel %vm839, %v382, 0.0
        %v936 = vsel %vm840, %v383, 0.0
        %v937 = vsel %vm841, %v381, 0.0
        %v938 = vsel %vm842, %v382, 0.0
        %v939 = vsel %vm843, %v383, 0.0
        %v940 = vsel %vm844, %v381, 0.0
        %v941 = vsel %vm845, %v382, 0.0
        %v942 = vsel %vm846, %v383, 0.0
        %v943 = vsel %vm847, %v381, 0.0
        %v944 = vsel %vm848, %v382, 0.0
        %v945 = vsel %vm849, %v383, 0.0
        %v946 = vsel %vm850, %v381, 0.0
        %v947 = vsel %vm851, %v382, 0.0
        %v948 = vsel %vm852, %v383, 0.0
        %v949 = vsel %vm853, %v381, 0.0
        %v950 = vsel %vm854, %v382, 0.0
        %v951 = vsel %vm855, %v383, 0.0
        %v952 = vsel %vm856, %v381, 0.0
        %v953 = vsel %vm857, %v382, 0.0
        %v954 = vsel %vm858, %v383, 0.0
        %v955 = vsel %vm859, %v381, 0.0
        %v956 = vsel %vm860, %v382, 0.0
        %v957 = vsel %vm861, %v383, 0.0
        %v958 = vsel %vm862, %v381, 0.0
        %v959 = vsel %vm863, %v382, 0.0
        %v960 = vsel %vm864, %v383, 0.0
        %v961 = vadd.f32 %v673, %v865
        %v962 = vadd.f32 %v674, %v866
        %v963 = vadd.f32 %v675, %v867
        %v964 = vadd.f32 %v676, %v868
        %v965 = vadd.f32 %v677, %v869
        %v966 = vadd.f32 %v678, %v870
        %v967 = vadd.f32 %v679, %v871
        %v968 = vadd.f32 %v680, %v872
        %v969 = vadd.f32 %v681, %v873
        %v970 = vadd.f32 %v682, %v874
        %v971 = vadd.f32 %v683, %v875
        %v972 = vadd.f32 %v684, %v876
        %v973 = vadd.f32 %v685, %v877
        %v974 = vadd.f32 %v686, %v878
        %v975 = vadd.f32 %v687, %v879
        %v976 = vadd.f32 %v688, %v880
        %v977 = vadd.f32 %v689, %v881
        %v978 = vadd.f32 %v690, %v882
        %v979 = vadd.f32 %v691, %v883
        %v980 = vadd.f32 %v692, %v884
        %v981 = vadd.f32 %v693, %v885
        %v982 = vadd.f32 %v694, %v886
        %v983 = vadd.f32 %v695, %v887
        %v984 = vadd.f32 %v696, %v888
        %v985 = vadd.f32 %v697, %v889
        %v986 = vadd.f32 %v698, %v890
        %v987 = vadd.f32 %v699, %v891
        %v988 = vadd.f32 %v700, %v892
        %v989 = vadd.f32 %v701, %v893
        %v990 = vadd.f32 %v702, %v894
        %v991 = vadd.f32 %v703, %v895
        %v992 = vadd.f32 %v704, %v896
        %v993 = vadd.f32 %v705, %v897
        %v994 = vadd.f32 %v706, %v898
        %v995 = vadd.f32 %v707, %v899
        %v996 = vadd.f32 %v708, %v900
        %v997 = vadd.f32 %v709, %v901
        %v998 = vadd.f32 %v710, %v902
        %v999 = vadd.f32 %v711, %v903
        %v1000 = vadd.f32 %v712, %v904
        %v1001 = vadd.f32 %v713, %v905
        %v1002 = vadd.f32 %v714, %v906
        %v1003 = vadd.f32 %v715, %v907
        %v1004 = vadd.f32 %v716, %v908
        %v1005 = vadd.f32 %v717, %v909
        %v1006 = vadd.f32 %v718, %v910
        %v1007 = vadd.f32 %v719, %v911
        %v1008 = vadd.f32 %v720, %v912
        %v1009 = vadd.f32 %v721, %v913
        %v1010 = vadd.f32 %v722, %v914
        %v1011 = vadd.f32 %v723, %v915
        %v1012 = vadd.f32 %v724, %v916
        %v1013 = vadd.f32 %v725, %v917
        %v1014 = vadd.f32 %v726, %v918
        %v1015 = vadd.f32 %v727, %v919
        %v1016 = vadd.f32 %v728, %v920
        %v1017 = vadd.f32 %v729, %v921
        %v1018 = vadd.f32 %v730, %v922
        %v1019 = vadd.f32 %v731, %v923
        %v1020 = vadd.f32 %v732, %v924
        %v1021 = vadd.f32 %v733, %v925
        %v1022 = vadd.f32 %v734, %v926
        %v1023 = vadd.f32 %v735, %v927
        %v1024 = vadd.f32 %v736, %v928
        %v1025 = vadd.f32 %v737, %v929
        %v1026 = vadd.f32 %v738, %v930
        %v1027 = vadd.f32 %v739, %v931
        %v1028 = vadd.f32 %v740, %v932
        %v1029 = vadd.f32 %v741, %v933
        %v1030 = vadd.f32 %v742, %v934
        %v1031 = vadd.f32 %v743, %v935
        %v1032 = vadd.f32 %v744, %v936
        %v1033 = vadd.f32 %v745, %v937
        %v1034 = vadd.f32 %v746, %v938
        %v1035 = vadd.f32 %v747, %v939
        %v1036 = vadd.f32 %v748, %v940
        %v1037 = vadd.f32 %v749, %v941
        %v1038 = vadd.f32 %v750, %v942
        %v1039 = vadd.f32 %v751, %v943
        %v1040 = vadd.f32 %v752, %v944
        %v1041 = vadd.f32 %v753, %v945
        %v1042 = vadd.f32 %v754, %v946
        %v1043 = vadd.f32 %v755, %v947
        %v1044 = vadd.f32 %v756, %v948
        %v1045 = vadd.f32 %v757, %v949
        %v1046 = vadd.f32 %v758, %v950
        %v1047 = vadd.f32 %v759, %v951
        %v1048 = vadd.f32 %v760, %v952
        %v1049 = vadd.f32 %v761, %v953
        %v1050 = vadd.f32 %v762, %v954
        %v1051 = vadd.f32 %v763, %v955
        %v1052 = vadd.f32 %v764, %v956
        %v1053 = vadd.f32 %v765, %v957
        %v1054 = vadd.f32 %v766, %v958
        %v1055 = vadd.f32 %v767, %v959
        %v1056 = vadd.f32 %v768, %v960
        %vm1057 = vcmp.eq.s32.totalorder %v481, 16
        %vm1058 = vcmp.eq.s32.totalorder %v482, 16
        %vm1059 = vcmp.eq.s32.totalorder %v483, 16
        %vm1060 = vcmp.eq.s32.totalorder %v484, 16
        %vm1061 = vcmp.eq.s32.totalorder %v485, 16
        %vm1062 = vcmp.eq.s32.totalorder %v486, 16
        %vm1063 = vcmp.eq.s32.totalorder %v487, 16
        %vm1064 = vcmp.eq.s32.totalorder %v488, 16
        %vm1065 = vcmp.eq.s32.totalorder %v489, 16
        %vm1066 = vcmp.eq.s32.totalorder %v490, 16
        %vm1067 = vcmp.eq.s32.totalorder %v491, 16
        %vm1068 = vcmp.eq.s32.totalorder %v492, 16
        %vm1069 = vcmp.eq.s32.totalorder %v493, 16
        %vm1070 = vcmp.eq.s32.totalorder %v494, 16
        %vm1071 = vcmp.eq.s32.totalorder %v495, 16
        %vm1072 = vcmp.eq.s32.totalorder %v496, 16
        %vm1073 = vcmp.eq.s32.totalorder %v497, 16
        %vm1074 = vcmp.eq.s32.totalorder %v498, 16
        %vm1075 = vcmp.eq.s32.totalorder %v499, 16
        %vm1076 = vcmp.eq.s32.totalorder %v500, 16
        %vm1077 = vcmp.eq.s32.totalorder %v501, 16
        %vm1078 = vcmp.eq.s32.totalorder %v502, 16
        %vm1079 = vcmp.eq.s32.totalorder %v503, 16
        %vm1080 = vcmp.eq.s32.totalorder %v504, 16
        %vm1081 = vcmp.eq.s32.totalorder %v505, 16
        %vm1082 = vcmp.eq.s32.totalorder %v506, 16
        %vm1083 = vcmp.eq.s32.totalorder %v507, 16
        %vm1084 = vcmp.eq.s32.totalorder %v508, 16
        %vm1085 = vcmp.eq.s32.totalorder %v509, 16
        %vm1086 = vcmp.eq.s32.totalorder %v510, 16
        %vm1087 = vcmp.eq.s32.totalorder %v511, 16
        %vm1088 = vcmp.eq.s32.totalorder %v512, 16
        %vm1089 = vcmp.eq.s32.totalorder %v513, 16
        %vm1090 = vcmp.eq.s32.totalorder %v514, 16
        %vm1091 = vcmp.eq.s32.totalorder %v515, 16
        %vm1092 = vcmp.eq.s32.totalorder %v516, 16
        %vm1093 = vcmp.eq.s32.totalorder %v517, 16
        %vm1094 = vcmp.eq.s32.totalorder %v518, 16
        %vm1095 = vcmp.eq.s32.totalorder %v519, 16
        %vm1096 = vcmp.eq.s32.totalorder %v520, 16
        %vm1097 = vcmp.eq.s32.totalorder %v521, 16
        %vm1098 = vcmp.eq.s32.totalorder %v522, 16
        %vm1099 = vcmp.eq.s32.totalorder %v523, 16
        %vm1100 = vcmp.eq.s32.totalorder %v524, 16
        %vm1101 = vcmp.eq.s32.totalorder %v525, 16
        %vm1102 = vcmp.eq.s32.totalorder %v526, 16
        %vm1103 = vcmp.eq.s32.totalorder %v527, 16
        %vm1104 = vcmp.eq.s32.totalorder %v528, 16
        %vm1105 = vcmp.eq.s32.totalorder %v529, 16
        %vm1106 = vcmp.eq.s32.totalorder %v530, 16
        %vm1107 = vcmp.eq.s32.totalorder %v531, 16
        %vm1108 = vcmp.eq.s32.totalorder %v532, 16
        %vm1109 = vcmp.eq.s32.totalorder %v533, 16
        %vm1110 = vcmp.eq.s32.totalorder %v534, 16
        %vm1111 = vcmp.eq.s32.totalorder %v535, 16
        %vm1112 = vcmp.eq.s32.totalorder %v536, 16
        %vm1113 = vcmp.eq.s32.totalorder %v537, 16
        %vm1114 = vcmp.eq.s32.totalorder %v538, 16
        %vm1115 = vcmp.eq.s32.totalorder %v539, 16
        %vm1116 = vcmp.eq.s32.totalorder %v540, 16
        %vm1117 = vcmp.eq.s32.totalorder %v541, 16
        %vm1118 = vcmp.eq.s32.totalorder %v542, 16
        %vm1119 = vcmp.eq.s32.totalorder %v543, 16
        %vm1120 = vcmp.eq.s32.totalorder %v544, 16
        %vm1121 = vcmp.eq.s32.totalorder %v545, 16
        %vm1122 = vcmp.eq.s32.totalorder %v546, 16
        %vm1123 = vcmp.eq.s32.totalorder %v547, 16
        %vm1124 = vcmp.eq.s32.totalorder %v548, 16
        %vm1125 = vcmp.eq.s32.totalorder %v549, 16
        %vm1126 = vcmp.eq.s32.totalorder %v550, 16
        %vm1127 = vcmp.eq.s32.totalorder %v551, 16
        %vm1128 = vcmp.eq.s32.totalorder %v552, 16
        %vm1129 = vcmp.eq.s32.totalorder %v553, 16
        %vm1130 = vcmp.eq.s32.totalorder %v554, 16
        %vm1131 = vcmp.eq.s32.totalorder %v555, 16
        %vm1132 = vcmp.eq.s32.totalorder %v556, 16
        %vm1133 = vcmp.eq.s32.totalorder %v557, 16
        %vm1134 = vcmp.eq.s32.totalorder %v558, 16
        %vm1135 = vcmp.eq.s32.totalorder %v559, 16
        %vm1136 = vcmp.eq.s32.totalorder %v560, 16
        %vm1137 = vcmp.eq.s32.totalorder %v561, 16
        %vm1138 = vcmp.eq.s32.totalorder %v562, 16
        %vm1139 = vcmp.eq.s32.totalorder %v563, 16
        %vm1140 = vcmp.eq.s32.totalorder %v564, 16
        %vm1141 = vcmp.eq.s32.totalorder %v565, 16
        %vm1142 = vcmp.eq.s32.totalorder %v566, 16
        %vm1143 = vcmp.eq.s32.totalorder %v567, 16
        %vm1144 = vcmp.eq.s32.totalorder %v568, 16
        %vm1145 = vcmp.eq.s32.totalorder %v569, 16
        %vm1146 = vcmp.eq.s32.totalorder %v570, 16
        %vm1147 = vcmp.eq.s32.totalorder %v571, 16
        %vm1148 = vcmp.eq.s32.totalorder %v572, 16
        %vm1149 = vcmp.eq.s32.totalorder %v573, 16
        %vm1150 = vcmp.eq.s32.totalorder %v574, 16
        %vm1151 = vcmp.eq.s32.totalorder %v575, 16
        %vm1152 = vcmp.eq.s32.totalorder %v576, 16
        %v1153 = vsel %vm1057, %v402, 0.0
        %v1154 = vsel %vm1058, %v403, 0.0
        %v1155 = vsel %vm1059, %v404, 0.0
        %v1156 = vsel %vm1060, %v402, 0.0
        %v1157 = vsel %vm1061, %v403, 0.0
        %v1158 = vsel %vm1062, %v404, 0.0
        %v1159 = vsel %vm1063, %v402, 0.0
        %v1160 = vsel %vm1064, %v403, 0.0
        %v1161 = vsel %vm1065, %v404, 0.0
        %v1162 = vsel %vm1066, %v402, 0.0
        %v1163 = vsel %vm1067, %v403, 0.0
        %v1164 = vsel %vm1068, %v404, 0.0
        %v1165 = vsel %vm1069, %v402, 0.0
        %v1166 = vsel %vm1070, %v403, 0.0
        %v1167 = vsel %vm1071, %v404, 0.0
        %v1168 = vsel %vm1072, %v402, 0.0
        %v1169 = vsel %vm1073, %v403, 0.0
        %v1170 = vsel %vm1074, %v404, 0.0
        %v1171 = vsel %vm1075, %v402, 0.0
        %v1172 = vsel %vm1076, %v403, 0.0
        %v1173 = vsel %vm1077, %v404, 0.0
        %v1174 = vsel %vm1078, %v402, 0.0
        %v1175 = vsel %vm1079, %v403, 0.0
        %v1176 = vsel %vm1080, %v404, 0.0
        %v1177 = vsel %vm1081, %v402, 0.0
        %v1178 = vsel %vm1082, %v403, 0.0
        %v1179 = vsel %vm1083, %v404, 0.0
        %v1180 = vsel %vm1084, %v402, 0.0
        %v1181 = vsel %vm1085, %v403, 0.0
        %v1182 = vsel %vm1086, %v404, 0.0
        %v1183 = vsel %vm1087, %v402, 0.0
        %v1184 = vsel %vm1088, %v403, 0.0
        %v1185 = vsel %vm1089, %v404, 0.0
        %v1186 = vsel %vm1090, %v402, 0.0
        %v1187 = vsel %vm1091, %v403, 0.0
        %v1188 = vsel %vm1092, %v404, 0.0
        %v1189 = vsel %vm1093, %v402, 0.0
        %v1190 = vsel %vm1094, %v403, 0.0
        %v1191 = vsel %vm1095, %v404, 0.0
        %v1192 = vsel %vm1096, %v402, 0.0
        %v1193 = vsel %vm1097, %v403, 0.0
        %v1194 = vsel %vm1098, %v404, 0.0
        %v1195 = vsel %vm1099, %v402, 0.0
        %v1196 = vsel %vm1100, %v403, 0.0
        %v1197 = vsel %vm1101, %v404, 0.0
        %v1198 = vsel %vm1102, %v402, 0.0
        %v1199 = vsel %vm1103, %v403, 0.0
        %v1200 = vsel %vm1104, %v404, 0.0
        %v1201 = vsel %vm1105, %v402, 0.0
        %v1202 = vsel %vm1106, %v403, 0.0
        %v1203 = vsel %vm1107, %v404, 0.0
        %v1204 = vsel %vm1108, %v402, 0.0
        %v1205 = vsel %vm1109, %v403, 0.0
        %v1206 = vsel %vm1110, %v404, 0.0
        %v1207 = vsel %vm1111, %v402, 0.0
        %v1208 = vsel %vm1112, %v403, 0.0
        %v1209 = vsel %vm1113, %v404, 0.0
        %v1210 = vsel %vm1114, %v402, 0.0
        %v1211 = vsel %vm1115, %v403, 0.0
        %v1212 = vsel %vm1116, %v404, 0.0
        %v1213 = vsel %vm1117, %v402, 0.0
        %v1214 = vsel %vm1118, %v403, 0.0
        %v1215 = vsel %vm1119, %v404, 0.0
        %v1216 = vsel %vm1120, %v402, 0.0
        %v1217 = vsel %vm1121, %v403, 0.0
        %v1218 = vsel %vm1122, %v404, 0.0
        %v1219 = vsel %vm1123, %v402, 0.0
        %v1220 = vsel %vm1124, %v403, 0.0
        %v1221 = vsel %vm1125, %v404, 0.0
        %v1222 = vsel %vm1126, %v402, 0.0
        %v1223 = vsel %vm1127, %v403, 0.0
        %v1224 = vsel %vm1128, %v404, 0.0
        %v1225 = vsel %vm1129, %v402, 0.0
        %v1226 = vsel %vm1130, %v403, 0.0
        %v1227 = vsel %vm1131, %v404, 0.0
        %v1228 = vsel %vm1132, %v402, 0.0
        %v1229 = vsel %vm1133, %v403, 0.0
        %v1230 = vsel %vm1134, %v404, 0.0
        %v1231 = vsel %vm1135, %v402, 0.0
        %v1232 = vsel %vm1136, %v403, 0.0
        %v1233 = vsel %vm1137, %v404, 0.0
        %v1234 = vsel %vm1138, %v402, 0.0
        %v1235 = vsel %vm1139, %v403, 0.0
        %v1236 = vsel %vm1140, %v404, 0.0
        %v1237 = vsel %vm1141, %v402, 0.0
        %v1238 = vsel %vm1142, %v403, 0.0
        %v1239 = vsel %vm1143, %v404, 0.0
        %v1240 = vsel %vm1144, %v402, 0.0
        %v1241 = vsel %vm1145, %v403, 0.0
        %v1242 = vsel %vm1146, %v404, 0.0
        %v1243 = vsel %vm1147, %v402, 0.0
        %v1244 = vsel %vm1148, %v403, 0.0
        %v1245 = vsel %vm1149, %v404, 0.0
        %v1246 = vsel %vm1150, %v402, 0.0
        %v1247 = vsel %vm1151, %v403, 0.0
        %v1248 = vsel %vm1152, %v404, 0.0
        %v1249 = vadd.f32 %v961, %v1153
        %v1250 = vadd.f32 %v962, %v1154
        %v1251 = vadd.f32 %v963, %v1155
        %v1252 = vadd.f32 %v964, %v1156
        %v1253 = vadd.f32 %v965, %v1157
        %v1254 = vadd.f32 %v966, %v1158
        %v1255 = vadd.f32 %v967, %v1159
        %v1256 = vadd.f32 %v968, %v1160
        %v1257 = vadd.f32 %v969, %v1161
        %v1258 = vadd.f32 %v970, %v1162
        %v1259 = vadd.f32 %v971, %v1163
        %v1260 = vadd.f32 %v972, %v1164
        %v1261 = vadd.f32 %v973, %v1165
        %v1262 = vadd.f32 %v974, %v1166
        %v1263 = vadd.f32 %v975, %v1167
        %v1264 = vadd.f32 %v976, %v1168
        %v1265 = vadd.f32 %v977, %v1169
        %v1266 = vadd.f32 %v978, %v1170
        %v1267 = vadd.f32 %v979, %v1171
        %v1268 = vadd.f32 %v980, %v1172
        %v1269 = vadd.f32 %v981, %v1173
        %v1270 = vadd.f32 %v982, %v1174
        %v1271 = vadd.f32 %v983, %v1175
        %v1272 = vadd.f32 %v984, %v1176
        %v1273 = vadd.f32 %v985, %v1177
        %v1274 = vadd.f32 %v986, %v1178
        %v1275 = vadd.f32 %v987, %v1179
        %v1276 = vadd.f32 %v988, %v1180
        %v1277 = vadd.f32 %v989, %v1181
        %v1278 = vadd.f32 %v990, %v1182
        %v1279 = vadd.f32 %v991, %v1183
        %v1280 = vadd.f32 %v992, %v1184
        %v1281 = vadd.f32 %v993, %v1185
        %v1282 = vadd.f32 %v994, %v1186
        %v1283 = vadd.f32 %v995, %v1187
        %v1284 = vadd.f32 %v996, %v1188
        %v1285 = vadd.f32 %v997, %v1189
        %v1286 = vadd.f32 %v998, %v1190
        %v1287 = vadd.f32 %v999, %v1191
        %v1288 = vadd.f32 %v1000, %v1192
        %v1289 = vadd.f32 %v1001, %v1193
        %v1290 = vadd.f32 %v1002, %v1194
        %v1291 = vadd.f32 %v1003, %v1195
        %v1292 = vadd.f32 %v1004, %v1196
        %v1293 = vadd.f32 %v1005, %v1197
        %v1294 = vadd.f32 %v1006, %v1198
        %v1295 = vadd.f32 %v1007, %v1199
        %v1296 = vadd.f32 %v1008, %v1200
        %v1297 = vadd.f32 %v1009, %v1201
        %v1298 = vadd.f32 %v1010, %v1202
        %v1299 = vadd.f32 %v1011, %v1203
        %v1300 = vadd.f32 %v1012, %v1204
        %v1301 = vadd.f32 %v1013, %v1205
        %v1302 = vadd.f32 %v1014, %v1206
        %v1303 = vadd.f32 %v1015, %v1207
        %v1304 = vadd.f32 %v1016, %v1208
        %v1305 = vadd.f32 %v1017, %v1209
        %v1306 = vadd.f32 %v1018, %v1210
        %v1307 = vadd.f32 %v1019, %v1211
        %v1308 = vadd.f32 %v1020, %v1212
        %v1309 = vadd.f32 %v1021, %v1213
        %v1310 = vadd.f32 %v1022, %v1214
        %v1311 = vadd.f32 %v1023, %v1215
        %v1312 = vadd.f32 %v1024, %v1216
        %v1313 = vadd.f32 %v1025, %v1217
        %v1314 = vadd.f32 %v1026, %v1218
        %v1315 = vadd.f32 %v1027, %v1219
        %v1316 = vadd.f32 %v1028, %v1220
        %v1317 = vadd.f32 %v1029, %v1221
        %v1318 = vadd.f32 %v1030, %v1222
        %v1319 = vadd.f32 %v1031, %v1223
        %v1320 = vadd.f32 %v1032, %v1224
        %v1321 = vadd.f32 %v1033, %v1225
        %v1322 = vadd.f32 %v1034, %v1226
        %v1323 = vadd.f32 %v1035, %v1227
        %v1324 = vadd.f32 %v1036, %v1228
        %v1325 = vadd.f32 %v1037, %v1229
        %v1326 = vadd.f32 %v1038, %v1230
        %v1327 = vadd.f32 %v1039, %v1231
        %v1328 = vadd.f32 %v1040, %v1232
        %v1329 = vadd.f32 %v1041, %v1233
        %v1330 = vadd.f32 %v1042, %v1234
        %v1331 = vadd.f32 %v1043, %v1235
        %v1332 = vadd.f32 %v1044, %v1236
        %v1333 = vadd.f32 %v1045, %v1237
        %v1334 = vadd.f32 %v1046, %v1238
        %v1335 = vadd.f32 %v1047, %v1239
        %v1336 = vadd.f32 %v1048, %v1240
        %v1337 = vadd.f32 %v1049, %v1241
        %v1338 = vadd.f32 %v1050, %v1242
        %v1339 = vadd.f32 %v1051, %v1243
        %v1340 = vadd.f32 %v1052, %v1244
        %v1341 = vadd.f32 %v1053, %v1245
        %v1342 = vadd.f32 %v1054, %v1246
        %v1343 = vadd.f32 %v1055, %v1247
        %v1344 = vadd.f32 %v1056, %v1248
        %vm1345 = vcmp.eq.s32.totalorder %v481, 17
        %vm1346 = vcmp.eq.s32.totalorder %v482, 17
        %vm1347 = vcmp.eq.s32.totalorder %v483, 17
        %vm1348 = vcmp.eq.s32.totalorder %v484, 17
        %vm1349 = vcmp.eq.s32.totalorder %v485, 17
        %vm1350 = vcmp.eq.s32.totalorder %v486, 17
        %vm1351 = vcmp.eq.s32.totalorder %v487, 17
        %vm1352 = vcmp.eq.s32.totalorder %v488, 17
        %vm1353 = vcmp.eq.s32.totalorder %v489, 17
        %vm1354 = vcmp.eq.s32.totalorder %v490, 17
        %vm1355 = vcmp.eq.s32.totalorder %v491, 17
        %vm1356 = vcmp.eq.s32.totalorder %v492, 17
        %vm1357 = vcmp.eq.s32.totalorder %v493, 17
        %vm1358 = vcmp.eq.s32.totalorder %v494, 17
        %vm1359 = vcmp.eq.s32.totalorder %v495, 17
        %vm1360 = vcmp.eq.s32.totalorder %v496, 17
        %vm1361 = vcmp.eq.s32.totalorder %v497, 17
        %vm1362 = vcmp.eq.s32.totalorder %v498, 17
        %vm1363 = vcmp.eq.s32.totalorder %v499, 17
        %vm1364 = vcmp.eq.s32.totalorder %v500, 17
        %vm1365 = vcmp.eq.s32.totalorder %v501, 17
        %vm1366 = vcmp.eq.s32.totalorder %v502, 17
        %vm1367 = vcmp.eq.s32.totalorder %v503, 17
        %vm1368 = vcmp.eq.s32.totalorder %v504, 17
        %vm1369 = vcmp.eq.s32.totalorder %v505, 17
        %vm1370 = vcmp.eq.s32.totalorder %v506, 17
        %vm1371 = vcmp.eq.s32.totalorder %v507, 17
        %vm1372 = vcmp.eq.s32.totalorder %v508, 17
        %vm1373 = vcmp.eq.s32.totalorder %v509, 17
        %vm1374 = vcmp.eq.s32.totalorder %v510, 17
        %vm1375 = vcmp.eq.s32.totalorder %v511, 17
        %vm1376 = vcmp.eq.s32.totalorder %v512, 17
        %vm1377 = vcmp.eq.s32.totalorder %v513, 17
        %vm1378 = vcmp.eq.s32.totalorder %v514, 17
        %vm1379 = vcmp.eq.s32.totalorder %v515, 17
        %vm1380 = vcmp.eq.s32.totalorder %v516, 17
        %vm1381 = vcmp.eq.s32.totalorder %v517, 17
        %vm1382 = vcmp.eq.s32.totalorder %v518, 17
        %vm1383 = vcmp.eq.s32.totalorder %v519, 17
        %vm1384 = vcmp.eq.s32.totalorder %v520, 17
        %vm1385 = vcmp.eq.s32.totalorder %v521, 17
        %vm1386 = vcmp.eq.s32.totalorder %v522, 17
        %vm1387 = vcmp.eq.s32.totalorder %v523, 17
        %vm1388 = vcmp.eq.s32.totalorder %v524, 17
        %vm1389 = vcmp.eq.s32.totalorder %v525, 17
        %vm1390 = vcmp.eq.s32.totalorder %v526, 17
        %vm1391 = vcmp.eq.s32.totalorder %v527, 17
        %vm1392 = vcmp.eq.s32.totalorder %v528, 17
        %vm1393 = vcmp.eq.s32.totalorder %v529, 17
        %vm1394 = vcmp.eq.s32.totalorder %v530, 17
        %vm1395 = vcmp.eq.s32.totalorder %v531, 17
        %vm1396 = vcmp.eq.s32.totalorder %v532, 17
        %vm1397 = vcmp.eq.s32.totalorder %v533, 17
        %vm1398 = vcmp.eq.s32.totalorder %v534, 17
        %vm1399 = vcmp.eq.s32.totalorder %v535, 17
        %vm1400 = vcmp.eq.s32.totalorder %v536, 17
        %vm1401 = vcmp.eq.s32.totalorder %v537, 17
        %vm1402 = vcmp.eq.s32.totalorder %v538, 17
        %vm1403 = vcmp.eq.s32.totalorder %v539, 17
        %vm1404 = vcmp.eq.s32.totalorder %v540, 17
        %vm1405 = vcmp.eq.s32.totalorder %v541, 17
        %vm1406 = vcmp.eq.s32.totalorder %v542, 17
        %vm1407 = vcmp.eq.s32.totalorder %v543, 17
        %vm1408 = vcmp.eq.s32.totalorder %v544, 17
        %vm1409 = vcmp.eq.s32.totalorder %v545, 17
        %vm1410 = vcmp.eq.s32.totalorder %v546, 17
        %vm1411 = vcmp.eq.s32.totalorder %v547, 17
        %vm1412 = vcmp.eq.s32.totalorder %v548, 17
        %vm1413 = vcmp.eq.s32.totalorder %v549, 17
        %vm1414 = vcmp.eq.s32.totalorder %v550, 17
        %vm1415 = vcmp.eq.s32.totalorder %v551, 17
        %vm1416 = vcmp.eq.s32.totalorder %v552, 17
        %vm1417 = vcmp.eq.s32.totalorder %v553, 17
        %vm1418 = vcmp.eq.s32.totalorder %v554, 17
        %vm1419 = vcmp.eq.s32.totalorder %v555, 17
        %vm1420 = vcmp.eq.s32.totalorder %v556, 17
        %vm1421 = vcmp.eq.s32.totalorder %v557, 17
        %vm1422 = vcmp.eq.s32.totalorder %v558, 17
        %vm1423 = vcmp.eq.s32.totalorder %v559, 17
        %vm1424 = vcmp.eq.s32.totalorder %v560, 17
        %vm1425 = vcmp.eq.s32.totalorder %v561, 17
        %vm1426 = vcmp.eq.s32.totalorder %v562, 17
        %vm1427 = vcmp.eq.s32.totalorder %v563, 17
        %vm1428 = vcmp.eq.s32.totalorder %v564, 17
        %vm1429 = vcmp.eq.s32.totalorder %v565, 17
        %vm1430 = vcmp.eq.s32.totalorder %v566, 17
        %vm1431 = vcmp.eq.s32.totalorder %v567, 17
        %vm1432 = vcmp.eq.s32.totalorder %v568, 17
        %vm1433 = vcmp.eq.s32.totalorder %v569, 17
        %vm1434 = vcmp.eq.s32.totalorder %v570, 17
        %vm1435 = vcmp.eq.s32.totalorder %v571, 17
        %vm1436 = vcmp.eq.s32.totalorder %v572, 17
        %vm1437 = vcmp.eq.s32.totalorder %v573, 17
        %vm1438 = vcmp.eq.s32.totalorder %v574, 17
        %vm1439 = vcmp.eq.s32.totalorder %v575, 17
        %vm1440 = vcmp.eq.s32.totalorder %v576, 17
        %v1441 = vsel %vm1345, %v414, 0.0
        %v1442 = vsel %vm1346, %v415, 0.0
        %v1443 = vsel %vm1347, %v416, 0.0
        %v1444 = vsel %vm1348, %v414, 0.0
        %v1445 = vsel %vm1349, %v415, 0.0
        %v1446 = vsel %vm1350, %v416, 0.0
        %v1447 = vsel %vm1351, %v414, 0.0
        %v1448 = vsel %vm1352, %v415, 0.0
        %v1449 = vsel %vm1353, %v416, 0.0
        %v1450 = vsel %vm1354, %v414, 0.0
        %v1451 = vsel %vm1355, %v415, 0.0
        %v1452 = vsel %vm1356, %v416, 0.0
        %v1453 = vsel %vm1357, %v414, 0.0
        %v1454 = vsel %vm1358, %v415, 0.0
        %v1455 = vsel %vm1359, %v416, 0.0
        %v1456 = vsel %vm1360, %v414, 0.0
        %v1457 = vsel %vm1361, %v415, 0.0
        %v1458 = vsel %vm1362, %v416, 0.0
        %v1459 = vsel %vm1363, %v414, 0.0
        %v1460 = vsel %vm1364, %v415, 0.0
        %v1461 = vsel %vm1365, %v416, 0.0
        %v1462 = vsel %vm1366, %v414, 0.0
        %v1463 = vsel %vm1367, %v415, 0.0
        %v1464 = vsel %vm1368, %v416, 0.0
        %v1465 = vsel %vm1369, %v414, 0.0
        %v1466 = vsel %vm1370, %v415, 0.0
        %v1467 = vsel %vm1371, %v416, 0.0
        %v1468 = vsel %vm1372, %v414, 0.0
        %v1469 = vsel %vm1373, %v415, 0.0
        %v1470 = vsel %vm1374, %v416, 0.0
        %v1471 = vsel %vm1375, %v414, 0.0
        %v1472 = vsel %vm1376, %v415, 0.0
        %v1473 = vsel %vm1377, %v416, 0.0
        %v1474 = vsel %vm1378, %v414, 0.0
        %v1475 = vsel %vm1379, %v415, 0.0
        %v1476 = vsel %vm1380, %v416, 0.0
        %v1477 = vsel %vm1381, %v414, 0.0
        %v1478 = vsel %vm1382, %v415, 0.0
        %v1479 = vsel %vm1383, %v416, 0.0
        %v1480 = vsel %vm1384, %v414, 0.0
        %v1481 = vsel %vm1385, %v415, 0.0
        %v1482 = vsel %vm1386, %v416, 0.0
        %v1483 = vsel %vm1387, %v414, 0.0
        %v1484 = vsel %vm1388, %v415, 0.0
        %v1485 = vsel %vm1389, %v416, 0.0
        %v1486 = vsel %vm1390, %v414, 0.0
        %v1487 = vsel %vm1391, %v415, 0.0
        %v1488 = vsel %vm1392, %v416, 0.0
        %v1489 = vsel %vm1393, %v414, 0.0
        %v1490 = vsel %vm1394, %v415, 0.0
        %v1491 = vsel %vm1395, %v416, 0.0
        %v1492 = vsel %vm1396, %v414, 0.0
        %v1493 = vsel %vm1397, %v415, 0.0
        %v1494 = vsel %vm1398, %v416, 0.0
        %v1495 = vsel %vm1399, %v414, 0.0
        %v1496 = vsel %vm1400, %v415, 0.0
        %v1497 = vsel %vm1401, %v416, 0.0
        %v1498 = vsel %vm1402, %v414, 0.0
        %v1499 = vsel %vm1403, %v415, 0.0
        %v1500 = vsel %vm1404, %v416, 0.0
        %v1501 = vsel %vm1405, %v414, 0.0
        %v1502 = vsel %vm1406, %v415, 0.0
        %v1503 = vsel %vm1407, %v416, 0.0
        %v1504 = vsel %vm1408, %v414, 0.0
        %v1505 = vsel %vm1409, %v415, 0.0
        %v1506 = vsel %vm1410, %v416, 0.0
        %v1507 = vsel %vm1411, %v414, 0.0
        %v1508 = vsel %vm1412, %v415, 0.0
        %v1509 = vsel %vm1413, %v416, 0.0
        %v1510 = vsel %vm1414, %v414, 0.0
        %v1511 = vsel %vm1415, %v415, 0.0
        %v1512 = vsel %vm1416, %v416, 0.0
        %v1513 = vsel %vm1417, %v414, 0.0
        %v1514 = vsel %vm1418, %v415, 0.0
        %v1515 = vsel %vm1419, %v416, 0.0
        %v1516 = vsel %vm1420, %v414, 0.0
        %v1517 = vsel %vm1421, %v415, 0.0
        %v1518 = vsel %vm1422, %v416, 0.0
        %v1519 = vsel %vm1423, %v414, 0.0
        %v1520 = vsel %vm1424, %v415, 0.0
        %v1521 = vsel %vm1425, %v416, 0.0
        %v1522 = vsel %vm1426, %v414, 0.0
        %v1523 = vsel %vm1427, %v415, 0.0
        %v1524 = vsel %vm1428, %v416, 0.0
        %v1525 = vsel %vm1429, %v414, 0.0
        %v1526 = vsel %vm1430, %v415, 0.0
        %v1527 = vsel %vm1431, %v416, 0.0
        %v1528 = vsel %vm1432, %v414, 0.0
        %v1529 = vsel %vm1433, %v415, 0.0
        %v1530 = vsel %vm1434, %v416, 0.0
        %v1531 = vsel %vm1435, %v414, 0.0
        %v1532 = vsel %vm1436, %v415, 0.0
        %v1533 = vsel %vm1437, %v416, 0.0
        %v1534 = vsel %vm1438, %v414, 0.0
        %v1535 = vsel %vm1439, %v415, 0.0
        %v1536 = vsel %vm1440, %v416, 0.0
        %v1537 = vadd.f32 %v1249, %v1441
        %v1538 = vadd.f32 %v1250, %v1442
        %v1539 = vadd.f32 %v1251, %v1443
        %v1540 = vadd.f32 %v1252, %v1444
        %v1541 = vadd.f32 %v1253, %v1445
        %v1542 = vadd.f32 %v1254, %v1446
        %v1543 = vadd.f32 %v1255, %v1447
        %v1544 = vadd.f32 %v1256, %v1448
        %v1545 = vadd.f32 %v1257, %v1449
        %v1546 = vadd.f32 %v1258, %v1450
        %v1547 = vadd.f32 %v1259, %v1451
        %v1548 = vadd.f32 %v1260, %v1452
        %v1549 = vadd.f32 %v1261, %v1453
        %v1550 = vadd.f32 %v1262, %v1454
        %v1551 = vadd.f32 %v1263, %v1455
        %v1552 = vadd.f32 %v1264, %v1456
        %v1553 = vadd.f32 %v1265, %v1457
        %v1554 = vadd.f32 %v1266, %v1458
        %v1555 = vadd.f32 %v1267, %v1459
        %v1556 = vadd.f32 %v1268, %v1460
        %v1557 = vadd.f32 %v1269, %v1461
        %v1558 = vadd.f32 %v1270, %v1462
        %v1559 = vadd.f32 %v1271, %v1463
        %v1560 = vadd.f32 %v1272, %v1464
        %v1561 = vadd.f32 %v1273, %v1465
        %v1562 = vadd.f32 %v1274, %v1466
        %v1563 = vadd.f32 %v1275, %v1467
        %v1564 = vadd.f32 %v1276, %v1468
        %v1565 = vadd.f32 %v1277, %v1469
        %v1566 = vadd.f32 %v1278, %v1470
        %v1567 = vadd.f32 %v1279, %v1471
        %v1568 = vadd.f32 %v1280, %v1472
        %v1569 = vadd.f32 %v1281, %v1473
        %v1570 = vadd.f32 %v1282, %v1474
        %v1571 = vadd.f32 %v1283, %v1475
        %v1572 = vadd.f32 %v1284, %v1476
        %v1573 = vadd.f32 %v1285, %v1477
        %v1574 = vadd.f32 %v1286, %v1478
        %v1575 = vadd.f32 %v1287, %v1479
        %v1576 = vadd.f32 %v1288, %v1480
        %v1577 = vadd.f32 %v1289, %v1481
        %v1578 = vadd.f32 %v1290, %v1482
        %v1579 = vadd.f32 %v1291, %v1483
        %v1580 = vadd.f32 %v1292, %v1484
        %v1581 = vadd.f32 %v1293, %v1485
        %v1582 = vadd.f32 %v1294, %v1486
        %v1583 = vadd.f32 %v1295, %v1487
        %v1584 = vadd.f32 %v1296, %v1488
        %v1585 = vadd.f32 %v1297, %v1489
        %v1586 = vadd.f32 %v1298, %v1490
        %v1587 = vadd.f32 %v1299, %v1491
        %v1588 = vadd.f32 %v1300, %v1492
        %v1589 = vadd.f32 %v1301, %v1493
        %v1590 = vadd.f32 %v1302, %v1494
        %v1591 = vadd.f32 %v1303, %v1495
        %v1592 = vadd.f32 %v1304, %v1496
        %v1593 = vadd.f32 %v1305, %v1497
        %v1594 = vadd.f32 %v1306, %v1498
        %v1595 = vadd.f32 %v1307, %v1499
        %v1596 = vadd.f32 %v1308, %v1500
        %v1597 = vadd.f32 %v1309, %v1501
        %v1598 = vadd.f32 %v1310, %v1502
        %v1599 = vadd.f32 %v1311, %v1503
        %v1600 = vadd.f32 %v1312, %v1504
        %v1601 = vadd.f32 %v1313, %v1505
        %v1602 = vadd.f32 %v1314, %v1506
        %v1603 = vadd.f32 %v1315, %v1507
        %v1604 = vadd.f32 %v1316, %v1508
        %v1605 = vadd.f32 %v1317, %v1509
        %v1606 = vadd.f32 %v1318, %v1510
        %v1607 = vadd.f32 %v1319, %v1511
        %v1608 = vadd.f32 %v1320, %v1512
        %v1609 = vadd.f32 %v1321, %v1513
        %v1610 = vadd.f32 %v1322, %v1514
        %v1611 = vadd.f32 %v1323, %v1515
        %v1612 = vadd.f32 %v1324, %v1516
        %v1613 = vadd.f32 %v1325, %v1517
        %v1614 = vadd.f32 %v1326, %v1518
        %v1615 = vadd.f32 %v1327, %v1519
        %v1616 = vadd.f32 %v1328, %v1520
        %v1617 = vadd.f32 %v1329, %v1521
        %v1618 = vadd.f32 %v1330, %v1522
        %v1619 = vadd.f32 %v1331, %v1523
        %v1620 = vadd.f32 %v1332, %v1524
        %v1621 = vadd.f32 %v1333, %v1525
        %v1622 = vadd.f32 %v1334, %v1526
        %v1623 = vadd.f32 %v1335, %v1527
        %v1624 = vadd.f32 %v1336, %v1528
        %v1625 = vadd.f32 %v1337, %v1529
        %v1626 = vadd.f32 %v1338, %v1530
        %v1627 = vadd.f32 %v1339, %v1531
        %v1628 = vadd.f32 %v1340, %v1532
        %v1629 = vadd.f32 %v1341, %v1533
        %v1630 = vadd.f32 %v1342, %v1534
        %v1631 = vadd.f32 %v1343, %v1535
        %v1632 = vadd.f32 %v1344, %v1536
        %v1633 = vld [vmem:[%s170] sm:$0x77]
        %1635 = vst [vmem:[#allocation1] ss:$2 sm:$0xff] %v1633
        %v1636 = vld.sshfl [vmem:[#allocation1] sm:$0xff pattern:$0x75316420]
        %v1637 = vld.sshfl [vmem:[#allocation1 + $0x8] sm:$0xff pattern:$0x75316420]
        %1640 = vmatpush.msra.mxu0 %v1582
        %1641 = vmatpush.msra.mxu0 %v1579
        %1642 = vmatpush.msra.mxu0 %v1576
        %1643 = vmatpush.msra.mxu0 %v1573
        %1644 = vmatpush.msra.mxu0 %v1570
        %1645 = vmatpush.msra.mxu0 %v1567
        %1646 = vmatpush.msra.mxu0 %v1564
        %1647 = vmatpush.msra.mxu0 %v1561
        %1648 = vmatpush.msra.mxu0 %v1558
        %1649 = vmatpush.msra.mxu0 %v1555
        %1650 = vmatpush.msra.mxu0 %v1552
        %1651 = vmatpush.msra.mxu0 %v1549
        %1652 = vmatpush.msra.mxu0 %v1546
        %1653 = vmatpush.msra.mxu0 %v1543
        %1654 = vmatpush.msra.mxu0 %v1540
        %1655 = vmatpush.msra.mxu0 %v1537
        %1656 = vmatmul.f32.gmra.mxu0 %v1636
        %v1657 = vpop.f32.mrf.mxu0
        %v1658 = vadd.f32 0.0, %v1657
        %1659 = vdwg.mxu0
        %1660 = vmatpush.msra.mxu0 %v1630
        %1661 = vmatpush.msra.mxu0 %v1627
        %1662 = vmatpush.msra.mxu0 %v1624
        %1663 = vmatpush.msra.mxu0 %v1621
        %1664 = vmatpush.msra.mxu0 %v1618
        %1665 = vmatpush.msra.mxu0 %v1615
        %1666 = vmatpush.msra.mxu0 %v1612
        %1667 = vmatpush.msra.mxu0 %v1609
        %1668 = vmatpush.msra.mxu0 %v1606
        %1669 = vmatpush.msra.mxu0 %v1603
        %1670 = vmatpush.msra.mxu0 %v1600
        %1671 = vmatpush.msra.mxu0 %v1597
        %1672 = vmatpush.msra.mxu0 %v1594
        %1673 = vmatpush.msra.mxu0 %v1591
        %1674 = vmatpush.msra.mxu0 %v1588
        %1675 = vmatpush.msra.mxu0 %v1585
        %1676 = vmatmul.f32.gmra.mxu0 %v1637
        %v1677 = vpop.f32.mrf.mxu0
        %v1678 = vadd.f32 %v1658, %v1677
        %1679 = vdwg.mxu0
        %1680 = vmatpush.msra.mxu0 %v1583
        %1681 = vmatpush.msra.mxu0 %v1580
        %1682 = vmatpush.msra.mxu0 %v1577
        %1683 = vmatpush.msra.mxu0 %v1574
        %1684 = vmatpush.msra.mxu0 %v1571
        %1685 = vmatpush.msra.mxu0 %v1568
        %1686 = vmatpush.msra.mxu0 %v1565
        %1687 = vmatpush.msra.mxu0 %v1562
        %1688 = vmatpush.msra.mxu0 %v1559
        %1689 = vmatpush.msra.mxu0 %v1556
        %1690 = vmatpush.msra.mxu0 %v1553
        %1691 = vmatpush.msra.mxu0 %v1550
        %1692 = vmatpush.msra.mxu0 %v1547
        %1693 = vmatpush.msra.mxu0 %v1544
        %1694 = vmatpush.msra.mxu0 %v1541
        %1695 = vmatpush.msra.mxu0 %v1538
        %1696 = vmatmul.f32.gmra.mxu0 %v1636
        %v1697 = vpop.f32.mrf.mxu0
        %v1698 = vadd.f32 0.0, %v1697
        %1699 = vdwg.mxu0
        %1700 = vmatpush.msra.mxu0 %v1631
        %1701 = vmatpush.msra.mxu0 %v1628
        %1702 = vmatpush.msra.mxu0 %v1625
        %1703 = vmatpush.msra.mxu0 %v1622
        %1704 = vmatpush.msra.mxu0 %v1619
        %1705 = vmatpush.msra.mxu0 %v1616
        %1706 = vmatpush.msra.mxu0 %v1613
        %1707 = vmatpush.msra.mxu0 %v1610
        %1708 = vmatpush.msra.mxu0 %v1607
        %1709 = vmatpush.msra.mxu0 %v1604
        %1710 = vmatpush.msra.mxu0 %v1601
        %1711 = vmatpush.msra.mxu0 %v1598
        %1712 = vmatpush.msra.mxu0 %v1595
        %1713 = vmatpush.msra.mxu0 %v1592
        %1714 = vmatpush.msra.mxu0 %v1589
        %1715 = vmatpush.msra.mxu0 %v1586
        %1716 = vmatmul.f32.gmra.mxu0 %v1637
        %v1717 = vpop.f32.mrf.mxu0
        %v1718 = vadd.f32 %v1698, %v1717
        %1719 = vdwg.mxu0
        %1720 = vmatpush.msra.mxu0 %v1584
        %1721 = vmatpush.msra.mxu0 %v1581
        %1722 = vmatpush.msra.mxu0 %v1578
        %1723 = vmatpush.msra.mxu0 %v1575
        %1724 = vmatpush.msra.mxu0 %v1572
        %1725 = vmatpush.msra.mxu0 %v1569
        %1726 = vmatpush.msra.mxu0 %v1566
        %1727 = vmatpush.msra.mxu0 %v1563
        %1728 = vmatpush.msra.mxu0 %v1560
        %1729 = vmatpush.msra.mxu0 %v1557
        %1730 = vmatpush.msra.mxu0 %v1554
        %1731 = vmatpush.msra.mxu0 %v1551
        %1732 = vmatpush.msra.mxu0 %v1548
        %1733 = vmatpush.msra.mxu0 %v1545
        %1734 = vmatpush.msra.mxu0 %v1542
        %1735 = vmatpush.msra.mxu0 %v1539
        %1736 = vmatmul.f32.gmra.mxu0 %v1636
        %v1737 = vpop.f32.mrf.mxu0
        %v1738 = vadd.f32 0.0, %v1737
        %1739 = vdwg.mxu0
        %1740 = vmatpush.msra.mxu0 %v1632
        %1741 = vmatpush.msra.mxu0 %v1629
        %1742 = vmatpush.msra.mxu0 %v1626
        %1743 = vmatpush.msra.mxu0 %v1623
        %1744 = vmatpush.msra.mxu0 %v1620
        %1745 = vmatpush.msra.mxu0 %v1617
        %1746 = vmatpush.msra.mxu0 %v1614
        %1747 = vmatpush.msra.mxu0 %v1611
        %1748 = vmatpush.msra.mxu0 %v1608
        %1749 = vmatpush.msra.mxu0 %v1605
        %1750 = vmatpush.msra.mxu0 %v1602
        %1751 = vmatpush.msra.mxu0 %v1599
        %1752 = vmatpush.msra.mxu0 %v1596
        %1753 = vmatpush.msra.mxu0 %v1593
        %1754 = vmatpush.msra.mxu0 %v1590
        %1755 = vmatpush.msra.mxu0 %v1587
        %1756 = vmatmul.f32.gmra.mxu0 %v1637
        %v1757 = vpop.f32.mrf.mxu0
        %v1758 = vadd.f32 %v1738, %v1757
        %1759 = vdwg.mxu0
        %v1762 = vrot.slane %v1718, 4
        %vm1763 = vcmask 1043456
        %v1764 = vsel %vm1763, %v1678, %v1762
        %1766 = vst [vmem:[%s179] sm:$0x77] %v1764
        %1767 = vst [vmem:[%s179 + $0x8] sm:$0x7] %v1758
        %s1768 = smul.u32 3, %s19
        %p1769 = scmp.lt.s32.totalorder %s18, 1
        %s1770 = scalar_select %p1769, %s18, 1
        %p1771 = scmp.lt.s32.totalorder %s1768, 2
        %s1772 = scalar_select %p1771, %s1768, 2
        %s1773 = smul.addr %s1770, 3
        %s1774 = sadd.s32 %s1772, %s1773
        %s1775 = smul.addr %s1774, 4
        %s1776 = scalar_lea.vmem %s2, %s1775
        // Predicated region
        $region33: #{_lambda_.3} parent=27 // pred_check
          %p1777 = pneg %p93
        $region34: #{_lambda_.3} parent=27 // pred_check_branch
          %1779 = sbr.rel (%p1777) target = $region36
        $region35: #{_lambda_.3} parent=27 // pred_region
          %s1780 = smul.u32 3, %s19
        $region36: #{_lambda_.3} parent=27 // pred_fallthru
          _
      $region28: #{_lambda_.3} parent=5 // pred_fallthru
        _
      %p1781 = scmp.le.s32.totalorder 2, %s9
      // Predicated region
      $region37: #{_lambda_.3} parent=5 // pred_check
        %p1782 = pneg %p1781
      $region38: #{_lambda_.3} parent=5 // pred_check_branch
        %1784 = sbr.rel (%p1782) target = $region40
      $region39: #{_lambda_.3} parent=5 // pred_region
        %s1785 = ssub.s32 %s9, 2
        // Predicated region
        $region41: #{_lambda_.3} parent=39 // pred_check
          %p1786 = pneg %p99
        $region42: #{_lambda_.3} parent=39 // pred_check_branch
          %1788 = sbr.rel (%p1786) target = $region44
        $region43: #{_lambda_.3} parent=39 // pred_region
          %s1789 = smul.u32 3, %s21
          %p1790 = scmp.lt.s32.totalorder %s20, 1
          %s1791 = scalar_select %p1790, %s20, 1
          %p1792 = scmp.lt.s32.totalorder %s1789, 2
          %s1793 = scalar_select %p1792, %s1789, 2
          %s1794 = smul.addr %s1791, 3
          %s1795 = sadd.s32 %s1793, %s1794
          %s1796 = smul.addr %s1795, 4
          %s1797 = scalar_lea.vmem %s2, %s1796
        $region44: #{_lambda_.3} parent=39 // pred_fallthru
          _
      $region40: #{_lambda_.3} parent=5 // pred_fallthru
        _
    $region6: #{_lambda_.3} parent=1 // loop_footer
      %s13 = sadd.s32 1, %s9
    $region7: #{_lambda_.3} parent=1 // loop_footer_branch
      %8 = sbr.rel target = $region3
    $region8: #{_lambda_.3} parent=1 // loop_exit
      _
    %1798 = vsyncpa [#allocation3], 1
    %s1799 = scalar_lea.sflag [#allocation3], 1
    %1800 = vsyncpa %s1799, 1

</llo_original>
